<compile_context>
chip_gen: v6e
topology: v6e:2x2x1
jax: 0.10.0
libtpu: 0.0.40
codegen_flags: <defaults>
</compile_context>

<pallas_src>
import jax
import jax.numpy as jnp
import numpy as np
from jax.experimental import pallas as pl
from jax.experimental.pallas import tpu as pltpu

# ----- small, module-consistent hyperparameters -----
VOCAB = 64        # target_vocab_size
EMBED = 32        # embed_dim
HIDDEN = 32       # hidden_dim == attention_dim
NLAYERS = 2       # n_layers
SEQ = 8           # encoder sequence length
PAD_IDX = 1       # hp.pad_idx
T_STEPS = 8       # decode steps run inside one pallas_call

GATES = 3 * HIDDEN            # 96, torch gate order [r | z | n]
GATE_PAD = 128                # each gate gets its own 128-lane block
GSLAB = 3 * GATE_PAD          # 384-wide fused gate slab
HPAD = 128                    # hidden state padded to one full vreg row
VPAD = 128                    # vocab padded to 128 lanes (lane-dense stores)
IN0 = EMBED + HIDDEN          # GRU layer-0 input = [embedded | context]

# row offsets inside the packed GRU weight slab (all multiples of 8)
R_IH0E = 0
R_IH0C = EMBED
R_HH0 = EMBED + HIDDEN
R_IH1 = EMBED + 2 * HIDDEN
R_HH1 = EMBED + 3 * HIDDEN
GRUW_ROWS = EMBED + 4 * HIDDEN


def decoder_kernel(
    tok_ref,       # SMEM (T,) int32          scalar-prefetched token ids
    embed_ref,     # VMEM (VOCAB, EMBED)      embedding table (resident)
    enc_ref,       # VMEM (SEQ, HIDDEN)       encoder states (resident)
    encp_ref,      # VMEM (SEQ, HIDDEN)       enc @ W_enc, hoisted (resident)
    hinit_ref,     # VMEM (NLAYERS, HPAD)     initial hidden, lane-padded
    att_ref,       # VMEM (HIDDEN+1, HIDDEN)  [W_dec ; v_att row]
    gru_w_ref,     # VMEM (GRUW_ROWS, GSLAB)  [Wih0_e; Wih0_c; Whh0; Wih1; Whh1]
    gru_b_ref,     # VMEM (4, GSLAB)          [b_ih0; b_hh0; b_ih1; b_hh1]
    out_wb_ref,    # VMEM (2*HIDDEN+1, VPAD)  [W_out_h; W_out_c; b_out]
    logits_ref,    # out  (T, VPAD)           resident, one HBM flush at end
    newh_ref,      # out  (NLAYERS, HPAD)     resident, written at last step
    alpha_ref,     # out  (T, SEQ)            resident, one HBM flush at end
    h0_s,          # scratch VMEM (1, HPAD)   layer-0 hidden (persists)
    h1_s,          # scratch VMEM (1, HPAD)   layer-1 hidden (persists)
):
    f32 = jnp.float32
    H = HIDDEN
    GP = GATE_PAD
    t = pl.program_id(0)

    # ---- step-0 prologue: load initial hidden state into persistent scratch ----
    @pl.when(t == 0)
    def _():
        h0_s[...] = hinit_ref[0:1, :]
        h1_s[...] = hinit_ref[1:2, :]

    # ---- embedding lookup (in-kernel gather, clamped against VMEM OOB) ----
    tok = jnp.clip(tok_ref[t], 0, VOCAB - 1)
    emb = embed_ref[pl.ds(tok, 1), :]                                 # (1, E)

    h0 = h0_s[...]                                                    # (1, HPAD)
    h1 = h1_s[...]                                                    # (1, HPAD)
    h1v = h1[:, :H]                                                   # (1, H) valid lanes

    # ---- AttentionModule (encoder projection hoisted; only decoder side here) ----
    dec_p = jnp.dot(h1v, att_ref[0:H, :], preferred_element_type=f32)      # (1, H)
    scores = jnp.tanh(encp_ref[...] + dec_p)                               # (S, H)
    v_row = att_ref[H:H + 1, :]                                            # (1, H)
    # TODO(synk): the single (S,H) transpose below could be removed by carrying a
    # transposed-score path, at the cost of an equivalent small relayout elsewhere.
    att = jnp.dot(v_row, scores.T, preferred_element_type=f32)             # (1, S)
    att = att - jnp.max(att, axis=-1, keepdims=True)
    e = jnp.exp(att)
    alpha = e / jnp.sum(e, axis=-1, keepdims=True)                         # (1, S)
    context = jnp.dot(alpha, enc_ref[...], preferred_element_type=f32)     # (1, H)

    # ---- 2-layer GRU step: vreg-aligned gate blocks, split dots (no concats) ----
    def gates(gi, gh, h_prev):
        r = jax.nn.sigmoid(gi[:, 0:GP] + gh[:, 0:GP])
        z = jax.nn.sigmoid(gi[:, GP:2 * GP] + gh[:, GP:2 * GP])
        n = jnp.tanh(gi[:, 2 * GP:3 * GP] + r * gh[:, 2 * GP:3 * GP])
        return (1.0 - z) * n + z * h_prev        # pad lanes stay exactly 0

    gi0 = (jnp.dot(emb, gru_w_ref[R_IH0E:R_IH0E + EMBED, :], preferred_element_type=f32)
           + jnp.dot(context, gru_w_ref[R_IH0C:R_IH0C + H, :], preferred_element_type=f32)
           + gru_b_ref[0:1, :])
    gh0 = (jnp.dot(h0[:, :H], gru_w_ref[R_HH0:R_HH0 + H, :], preferred_element_type=f32)
           + gru_b_ref[1:2, :])
    h0_new = gates(gi0, gh0, h0)                                           # (1, HPAD)

    # TODO(synk): nn.GRU inter-layer dropout is training-mode only; eval forward.
    gi1 = (jnp.dot(h0_new[:, :H], gru_w_ref[R_IH1:R_IH1 + H, :], preferred_element_type=f32)
           + gru_b_ref[2:3, :])
    gh1 = (jnp.dot(h1[:, :H], gru_w_ref[R_HH1:R_HH1 + H, :], preferred_element_type=f32)
           + gru_b_ref[3:4, :])
    h1_new = gates(gi1, gh1, h1)                                           # (1, HPAD)

    # ---- output projection: out(cat([rnn_output, context])) as split dots ----
    logits = (jnp.dot(h1_new[:, :H], out_wb_ref[0:H, :], preferred_element_type=f32)
              + jnp.dot(context, out_wb_ref[H:2 * H, :], preferred_element_type=f32)
              + out_wb_ref[2 * H:2 * H + 1, :])                            # (1, VPAD)

    # ---- state carry + resident-output stores ----
    h0_s[...] = h0_new
    h1_s[...] = h1_new
    logits_ref[pl.ds(t, 1), :] = logits
    alpha_ref[pl.ds(t, 1), :] = alpha

    @pl.when(t == pl.num_programs(0) - 1)
    def _():
        newh_ref[0:1, :] = h0_new
        newh_ref[1:2, :] = h1_new


def init_params(key):
    ks = jax.random.split(key, 14)

    def w(k, shape, scale=0.1):
        return (scale * jax.random.normal(k, shape)).astype(jnp.float32)

    p = {}
    p["embed"] = w(ks[0], (VOCAB, EMBED)).at[PAD_IDX].set(0.0)  # padding_idx row zeroed
    p["w_enc"] = w(ks[1], (HIDDEN, HIDDEN))
    p["w_dec"] = w(ks[2], (HIDDEN, HIDDEN))
    p["v_att"] = w(ks[3], (HIDDEN, 1))
    p["w_ih0"] = w(ks[4], (IN0, GATES))        # rows = [embedded | context], cols = [r|z|n]
    p["w_hh0"] = w(ks[5], (HIDDEN, GATES))
    p["b_ih0"] = w(ks[6], (1, GATES))
    p["b_hh0"] = w(ks[7], (1, GATES))
    p["w_ih1"] = w(ks[8], (HIDDEN, GATES))
    p["w_hh1"] = w(ks[9], (HIDDEN, GATES))
    p["b_ih1"] = w(ks[10], (1, GATES))
    p["b_hh1"] = w(ks[11], (1, GATES))
    p["w_out"] = w(ks[12], (2 * HIDDEN, VOCAB))  # rows = [rnn_output | context]
    p["b_out"] = w(ks[13], (1, VOCAB))
    return p


def pack_params(p):
    """Pack raw params into resident VMEM slabs (per-gate 128-lane padding)."""
    def pad_gate_cols(x):  # (K, 3H) -> (K, 3*GATE_PAD); gate g in lanes [g*128, g*128+H)
        out = jnp.zeros((x.shape[0], GSLAB), jnp.float32)
        for g in range(3):
            out = out.at[:, g * GATE_PAD:g * GATE_PAD + HIDDEN].set(
                x[:, g * HIDDEN:(g + 1) * HIDDEN])
        return out

    def pad_vocab(x):      # (K, VOCAB) -> (K, VPAD)
        return jnp.pad(x, ((0, 0), (0, VPAD - VOCAB)))

    gru_w = jnp.concatenate(
        [pad_gate_cols(p["w_ih0"][:EMBED]), pad_gate_cols(p["w_ih0"][EMBED:]),
         pad_gate_cols(p["w_hh0"]), pad_gate_cols(p["w_ih1"]),
         pad_gate_cols(p["w_hh1"])], axis=0)                         # (160, 384)
    gru_b = jnp.concatenate(
        [pad_gate_cols(p["b_ih0"]), pad_gate_cols(p["b_hh0"]),
         pad_gate_cols(p["b_ih1"]), pad_gate_cols(p["b_hh1"])], axis=0)  # (4, 384)
    att = jnp.concatenate([p["w_dec"], p["v_att"].reshape(1, HIDDEN)], axis=0)  # (33, 32)
    out_wb = jnp.concatenate([pad_vocab(p["w_out"]), pad_vocab(p["b_out"])], axis=0)  # (65, 128)
    return {"embed": p["embed"], "w_enc": p["w_enc"], "att": att,
            "gru_w": gru_w, "gru_b": gru_b, "out_wb": out_wb}


@jax.jit
def decoder_forward(packed, tokens, encoder_out, decoder_hidden):
    """Runs T teacher-forced decode steps inside one pallas_call.

    tokens:         (T,)   int32    token id per decode step
    encoder_out:    (SEQ, 1, HIDDEN)
    decoder_hidden: (NLAYERS, 1, HIDDEN)
    returns: logits (T,1,VOCAB), final hidden (NLAYERS,1,HIDDEN), alphas (T,1,1,SEQ)
    """
    T = tokens.shape[0]
    enc2d = encoder_out[:, 0, :]                                   # (SEQ, HIDDEN)
    enc_proj = jnp.dot(enc2d, packed["w_enc"])                     # hoisted, step-invariant
    h_init = jnp.pad(decoder_hidden[:, 0, :],
                     ((0, 0), (0, HPAD - HIDDEN)))                 # (NLAYERS, HPAD)

    const = lambda t, tok: (0, 0)
    grid_spec = pltpu.PrefetchScalarGridSpec(
        num_scalar_prefetch=1,
        grid=(T,),
        in_specs=[
            pl.BlockSpec((VOCAB, EMBED), const),          # embed table
            pl.BlockSpec((SEQ, HIDDEN), const),           # encoder states
            pl.BlockSpec((SEQ, HIDDEN), const),           # hoisted enc projection
            pl.BlockSpec((NLAYERS, HPAD), const),         # initial hidden
            pl.BlockSpec((HIDDEN + 1, HIDDEN), const),    # [W_dec ; v_att]
            pl.BlockSpec((GRUW_ROWS, GSLAB), const),      # GRU weights
            pl.BlockSpec((4, GSLAB), const),              # GRU biases
            pl.BlockSpec((2 * HIDDEN + 1, VPAD), const),  # [W_out ; b_out]
        ],
        out_specs=(
            pl.BlockSpec((T, VPAD), const),               # logits (resident)
            pl.BlockSpec((NLAYERS, HPAD), const),         # final hidden (resident)
            pl.BlockSpec((T, SEQ), const),                # alphas (resident)
        ),
        scratch_shapes=[pltpu.VMEM((1, HPAD), jnp.float32),
                        pltpu.VMEM((1, HPAD), jnp.float32)],
    )

    logits_pad, newh_pad, alphas = pl.pallas_call(
        decoder_kernel,
        out_shape=(jax.ShapeDtypeStruct((T, VPAD), jnp.float32),
                   jax.ShapeDtypeStruct((NLAYERS, HPAD), jnp.float32),
                   jax.ShapeDtypeStruct((T, SEQ), jnp.float32)),
        grid_spec=grid_spec,
        compiler_params=pltpu.CompilerParams(dimension_semantics=("arbitrary",)),
    )(tokens.astype(jnp.int32), packed["embed"], enc2d, enc_proj, h_init,
      packed["att"], packed["gru_w"], packed["gru_b"], packed["out_wb"])

    outputs = logits_pad[:, :VOCAB].reshape(T, 1, VOCAB)           # per-step (1,1,V) stacked
    new_hidden = newh_pad[:, :HIDDEN].reshape(NLAYERS, 1, HIDDEN)
    alpha_out = alphas.reshape(T, 1, 1, SEQ)                       # per-step alpha.permute(2,0,1)
    return outputs, new_hidden, alpha_out


def reference_forward(p, tokens, encoder_out, decoder_hidden):
    """Pure-JAX reference mirroring the torch Decoder.forward, applied T times."""
    H = HIDDEN
    enc = encoder_out[:, 0, :]
    h = decoder_hidden[:, 0, :]                       # (NLAYERS, H)
    logits_all, alpha_all = [], []

    def gru(x, hh, w_ih, w_hh, b_ih, b_hh):
        gi = x @ w_ih + b_ih
        gh = hh @ w_hh + b_hh
        r = jax.nn.sigmoid(gi[:, 0:H] + gh[:, 0:H])
        z = jax.nn.sigmoid(gi[:, H:2 * H] + gh[:, H:2 * H])
        n = jnp.tanh(gi[:, 2 * H:] + r * gh[:, 2 * H:])
        return (1.0 - z) * n + z * hh

    for t in range(tokens.shape[0]):
        emb = p["embed"][tokens[t]].reshape(1, EMBED)
        h0, h1 = h[0:1], h[1:2]
        scores = jnp.tanh(enc @ p["w_enc"] + h1 @ p["w_dec"])
        att = scores @ p["v_att"]                     # (S, 1)
        alpha = jax.nn.softmax(att, axis=0)
        context = jnp.sum(alpha * enc, axis=0, keepdims=True)
        x0 = jnp.concatenate([emb, context], axis=-1)
        h0n = gru(x0, h0, p["w_ih0"], p["w_hh0"], p["b_ih0"], p["b_hh0"])
        h1n = gru(h0n, h1, p["w_ih1"], p["w_hh1"], p["b_ih1"], p["b_hh1"])
        logit = jnp.concatenate([h1n, context], axis=-1) @ p["w_out"] + p["b_out"]
        h = jnp.concatenate([h0n, h1n], axis=0)
        logits_all.append(logit)
        alpha_all.append(alpha.reshape(1, SEQ))

    return (jnp.stack(logits_all).reshape(-1, 1, VOCAB),
            h.reshape(NLAYERS, 1, HIDDEN),
            jnp.stack(alpha_all).reshape(-1, 1, 1, SEQ))


if __name__ == "__main__":
    key = jax.random.PRNGKey(0)
    pkey, k1, k2, k3 = jax.random.split(key, 4)
    raw_params = init_params(pkey)
    packed = pack_params(raw_params)

    tokens = jax.random.randint(k3, (T_STEPS,), 0, VOCAB, dtype=jnp.int32)
    encoder_out = jax.random.normal(k1, (SEQ, 1, HIDDEN), jnp.float32)     # (seq, batch, dim)
    decoder_hidden = jax.random.normal(k2, (NLAYERS, 1, HIDDEN), jnp.float32)

    out, new_h, alpha = decoder_forward(packed, tokens, encoder_out, decoder_hidden)
    jax.block_until_ready((out, new_h, alpha))

    ref_out, ref_h, ref_alpha = reference_forward(raw_params, tokens, encoder_out, decoder_hidden)
    np.testing.assert_allclose(np.asarray(out), np.asarray(ref_out), rtol=2e-3, atol=2e-3)
    np.testing.assert_allclose(np.asarray(new_h), np.asarray(ref_h), rtol=2e-3, atol=2e-3)
    np.testing.assert_allclose(np.asarray(alpha), np.asarray(ref_alpha), rtol=2e-3, atol=2e-3)
    assert out.shape == (T_STEPS, 1, VOCAB)
    assert new_h.shape == (NLAYERS, 1, HIDDEN)
    assert alpha.shape == (T_STEPS, 1, 1, SEQ)

    print("KERNEL_OK")
</pallas_src>

<mosaic_0001>
module attributes {stable_mosaic.version = 11 : i64} {
  func.func @decoder_kernel(%arg0: i32, %arg1: memref<8xi32, #tpu.memory_space<smem>>, %arg2: memref<64x32xf32, #tpu.memory_space<vmem>>, %arg3: memref<8x32xf32, #tpu.memory_space<vmem>>, %arg4: memref<8x32xf32, #tpu.memory_space<vmem>>, %arg5: memref<2x128xf32, #tpu.memory_space<vmem>>, %arg6: memref<33x32xf32, #tpu.memory_space<vmem>>, %arg7: memref<160x384xf32, #tpu.memory_space<vmem>>, %arg8: memref<4x384xf32, #tpu.memory_space<vmem>>, %arg9: memref<65x128xf32, #tpu.memory_space<vmem>>, %arg10: memref<8x128xf32, #tpu.memory_space<vmem>>, %arg11: memref<2x128xf32, #tpu.memory_space<vmem>>, %arg12: memref<8x8xf32, #tpu.memory_space<vmem>>, %arg13: memref<1x128xf32, #tpu.memory_space<vmem>>, %arg14: memref<1x128xf32, #tpu.memory_space<vmem>>) attributes {dimension_semantics = [#tpu.dimension_semantics<arbitrary>], iteration_bounds = array<i64: 8>, scalar_prefetch = 1 : i64, scratch_operands = 2 : i64, tpu.core_type = #tpu.core_type<tc>, window_params = [{pipeline_mode = #tpu.pipeline_mode<synchronous>, transform_indices = @transform_0, window_bounds = array<i64: 64, 32>}, {pipeline_mode = #tpu.pipeline_mode<synchronous>, transform_indices = @transform_1, window_bounds = array<i64: 8, 32>}, {pipeline_mode = #tpu.pipeline_mode<synchronous>, transform_indices = @transform_2, window_bounds = array<i64: 8, 32>}, {pipeline_mode = #tpu.pipeline_mode<synchronous>, transform_indices = @transform_3, window_bounds = array<i64: 2, 128>}, {pipeline_mode = #tpu.pipeline_mode<synchronous>, transform_indices = @transform_4, window_bounds = array<i64: 33, 32>}, {pipeline_mode = #tpu.pipeline_mode<synchronous>, transform_indices = @transform_5, window_bounds = array<i64: 160, 384>}, {pipeline_mode = #tpu.pipeline_mode<synchronous>, transform_indices = @transform_6, window_bounds = array<i64: 4, 384>}, {pipeline_mode = #tpu.pipeline_mode<synchronous>, transform_indices = @transform_7, window_bounds = array<i64: 65, 128>}, {pipeline_mode = #tpu.pipeline_mode<synchronous>, transform_indices = @transform_8, window_bounds = array<i64: 8, 128>}, {pipeline_mode = #tpu.pipeline_mode<synchronous>, transform_indices = @transform_9, window_bounds = array<i64: 2, 128>}, {pipeline_mode = #tpu.pipeline_mode<synchronous>, transform_indices = @transform_10, window_bounds = array<i64: 8, 8>}]} {
    %c0_i32 = arith.constant 0 : i32
    %0 = arith.cmpi eq, %arg0, %c0_i32 : i32
    %1 = arith.extui %0 : i1 to i32
    %c0_i32_0 = arith.constant 0 : i32
    %2 = arith.cmpi ne, %1, %c0_i32_0 : i32
    scf.if %2 {
      %c0_55 = arith.constant 0 : index
      %c0_56 = arith.constant 0 : index
      %123 = vector.load %arg5[%c0_55, %c0_56] : memref<2x128xf32, #tpu.memory_space<vmem>>, vector<1x128xf32>
      %c0_57 = arith.constant 0 : index
      %c0_58 = arith.constant 0 : index
      %124 = vector.load %arg13[%c0_57, %c0_58] : memref<1x128xf32, #tpu.memory_space<vmem>>, vector<1x128xf32>
      tpu.vector_store %arg13[%c0_57, %c0_58], %123 {strides = array<i32>} : memref<1x128xf32, #tpu.memory_space<vmem>>, vector<1x128xf32>,
      %c1_59 = arith.constant 1 : index
      %c0_60 = arith.constant 0 : index
      %125 = vector.load %arg5[%c1_59, %c0_60] : memref<2x128xf32, #tpu.memory_space<vmem>>, vector<1x128xf32>
      %c0_61 = arith.constant 0 : index
      %c0_62 = arith.constant 0 : index
      %126 = vector.load %arg14[%c0_61, %c0_62] : memref<1x128xf32, #tpu.memory_space<vmem>>, vector<1x128xf32>
      tpu.vector_store %arg14[%c0_61, %c0_62], %125 {strides = array<i32>} : memref<1x128xf32, #tpu.memory_space<vmem>>, vector<1x128xf32>,
    } else {
    }
    %3 = arith.index_cast %arg0 : i32 to index
    %4 = memref.load %arg1[%3] : memref<8xi32, #tpu.memory_space<smem>>
    %c0_i32_1 = arith.constant 0 : i32
    %c63_i32 = arith.constant 63 : i32
    %5 = arith.maxsi %c0_i32_1, %4 : i32
    %6 = arith.minsi %c63_i32, %5 : i32
    %7 = arith.index_cast %6 : i32 to index
    %c0 = arith.constant 0 : index
    %8 = vector.load %arg2[%7, %c0] : memref<64x32xf32, #tpu.memory_space<vmem>>, vector<1x32xf32>
    %c0_2 = arith.constant 0 : index
    %c0_3 = arith.constant 0 : index
    %9 = vector.load %arg13[%c0_2, %c0_3] : memref<1x128xf32, #tpu.memory_space<vmem>>, vector<1x128xf32>
    %c0_4 = arith.constant 0 : index
    %c0_5 = arith.constant 0 : index
    %10 = vector.load %arg14[%c0_4, %c0_5] : memref<1x128xf32, #tpu.memory_space<vmem>>, vector<1x128xf32>
    %11 = vector.extract_strided_slice %10 {offsets = [0, 0], sizes = [1, 32], strides = [1, 1]} : vector<1x128xf32> to vector<1x32xf32>
    %c0_6 = arith.constant 0 : index
    %c0_7 = arith.constant 0 : index
    %12 = vector.load %arg6[%c0_6, %c0_7] : memref<33x32xf32, #tpu.memory_space<vmem>>, vector<32x32xf32>
    %cst = arith.constant dense<0.000000e+00> : vector<1x32xf32>
    %13 = tpu.matmul %11, %12, %cst {dimension_numbers = #tpu.dot_dimension_numbers<[1], [0], [0], [1], [0, 0, 1, 1], [], []>} : vector<1x32xf32>, vector<32x32xf32>, vector<1x32xf32> -> vector<1x32xf32>
    %c0_8 = arith.constant 0 : index
    %c0_9 = arith.constant 0 : index
    %14 = vector.load %arg4[%c0_8, %c0_9] : memref<8x32xf32, #tpu.memory_space<vmem>>, vector<8x32xf32>
    %15 = vector.broadcast %13 : vector<1x32xf32> to vector<8x32xf32>
    %16 = arith.addf %14, %15 : vector<8x32xf32>
    %17 = math.tanh %16 : vector<8x32xf32>
    %c32 = arith.constant 32 : index
    %c0_10 = arith.constant 0 : index
    %18 = vector.load %arg6[%c32, %c0_10] : memref<33x32xf32, #tpu.memory_space<vmem>>, vector<1x32xf32>
    %19 = tpu.transpose %17, [1, 0] : vector<8x32xf32> -> vector<32x8xf32>
    %cst_11 = arith.constant dense<0.000000e+00> : vector<1x8xf32>
    %20 = tpu.matmul %18, %19, %cst_11 {dimension_numbers = #tpu.dot_dimension_numbers<[1], [0], [0], [1], [0, 0, 1, 1], [], []>} : vector<1x32xf32>, vector<32x8xf32>, vector<1x8xf32> -> vector<1x8xf32>
    %cst_12 = arith.constant dense<0xFF800000> : vector<1xf32>
    %21 = vector.multi_reduction <maximumf>, %20, %cst_12 [1] : vector<1x8xf32> to vector<1xf32>
    %22 = vector.shape_cast %21 : vector<1xf32> to vector<1x1xf32>
    %23 = vector.broadcast %22 : vector<1x1xf32> to vector<1x8xf32>
    %24 = arith.subf %20, %23 : vector<1x8xf32>
    %25 = math.exp %24 : vector<1x8xf32>
    %cst_13 = arith.constant dense<0.000000e+00> : vector<1xf32>
    %26 = vector.multi_reduction <add>, %25, %cst_13 [1] : vector<1x8xf32> to vector<1xf32>
    %27 = vector.shape_cast %26 : vector<1xf32> to vector<1x1xf32>
    %28 = vector.broadcast %27 : vector<1x1xf32> to vector<1x8xf32>
    %29 = arith.divf %25, %28 : vector<1x8xf32>
    %c0_14 = arith.constant 0 : index
    %c0_15 = arith.constant 0 : index
    %30 = vector.load %arg3[%c0_14, %c0_15] : memref<8x32xf32, #tpu.memory_space<vmem>>, vector<8x32xf32>
    %cst_16 = arith.constant dense<0.000000e+00> : vector<1x32xf32>
    %31 = tpu.matmul %29, %30, %cst_16 {dimension_numbers = #tpu.dot_dimension_numbers<[1], [0], [0], [1], [0, 0, 1, 1], [], []>} : vector<1x8xf32>, vector<8x32xf32>, vector<1x32xf32> -> vector<1x32xf32>
    %c0_17 = arith.constant 0 : index
    %c0_18 = arith.constant 0 : index
    %32 = vector.load %arg7[%c0_17, %c0_18] : memref<160x384xf32, #tpu.memory_space<vmem>>, vector<32x384xf32>
    %cst_19 = arith.constant dense<0.000000e+00> : vector<1x384xf32>
    %33 = tpu.matmul %8, %32, %cst_19 {dimension_numbers = #tpu.dot_dimension_numbers<[1], [0], [0], [1], [0, 0, 1, 1], [], []>} : vector<1x32xf32>, vector<32x384xf32>, vector<1x384xf32> -> vector<1x384xf32>
    %c32_20 = arith.constant 32 : index
    %c0_21 = arith.constant 0 : index
    %34 = vector.load %arg7[%c32_20, %c0_21] : memref<160x384xf32, #tpu.memory_space<vmem>>, vector<32x384xf32>
    %cst_22 = arith.constant dense<0.000000e+00> : vector<1x384xf32>
    %35 = tpu.matmul %31, %34, %cst_22 {dimension_numbers = #tpu.dot_dimension_numbers<[1], [0], [0], [1], [0, 0, 1, 1], [], []>} : vector<1x32xf32>, vector<32x384xf32>, vector<1x384xf32> -> vector<1x384xf32>
    %36 = arith.addf %33, %35 : vector<1x384xf32>
    %c0_23 = arith.constant 0 : index
    %c0_24 = arith.constant 0 : index
    %37 = vector.load %arg8[%c0_23, %c0_24] : memref<4x384xf32, #tpu.memory_space<vmem>>, vector<1x384xf32>
    %38 = arith.addf %36, %37 : vector<1x384xf32>
    %39 = vector.extract_strided_slice %9 {offsets = [0, 0], sizes = [1, 32], strides = [1, 1]} : vector<1x128xf32> to vector<1x32xf32>
    %c64 = arith.constant 64 : index
    %c0_25 = arith.constant 0 : index
    %40 = vector.load %arg7[%c64, %c0_25] : memref<160x384xf32, #tpu.memory_space<vmem>>, vector<32x384xf32>
    %cst_26 = arith.constant dense<0.000000e+00> : vector<1x384xf32>
    %41 = tpu.matmul %39, %40, %cst_26 {dimension_numbers = #tpu.dot_dimension_numbers<[1], [0], [0], [1], [0, 0, 1, 1], [], []>} : vector<1x32xf32>, vector<32x384xf32>, vector<1x384xf32> -> vector<1x384xf32>
    %c1 = arith.constant 1 : index
    %c0_27 = arith.constant 0 : index
    %42 = vector.load %arg8[%c1, %c0_27] : memref<4x384xf32, #tpu.memory_space<vmem>>, vector<1x384xf32>
    %43 = arith.addf %41, %42 : vector<1x384xf32>
    %44 = vector.extract_strided_slice %38 {offsets = [0, 0], sizes = [1, 128], strides = [1, 1]} : vector<1x384xf32> to vector<1x128xf32>
    %45 = vector.extract_strided_slice %43 {offsets = [0, 0], sizes = [1, 128], strides = [1, 1]} : vector<1x384xf32> to vector<1x128xf32>
    %46 = arith.addf %44, %45 : vector<1x128xf32>
    %47 = arith.negf %46 : vector<1x128xf32>
    %48 = math.exp %47 : vector<1x128xf32>
    %cst_28 = arith.constant 1.000000e+00 : f32
    %49 = vector.broadcast %cst_28 : f32 to vector<1x128xf32>
    %50 = arith.addf %49, %48 : vector<1x128xf32>
    %51 = arith.divf %49, %50 : vector<1x128xf32>
    %52 = vector.extract_strided_slice %38 {offsets = [0, 128], sizes = [1, 128], strides = [1, 1]} : vector<1x384xf32> to vector<1x128xf32>
    %53 = vector.extract_strided_slice %43 {offsets = [0, 128], sizes = [1, 128], strides = [1, 1]} : vector<1x384xf32> to vector<1x128xf32>
    %54 = arith.addf %52, %53 : vector<1x128xf32>
    %55 = arith.negf %54 : vector<1x128xf32>
    %56 = math.exp %55 : vector<1x128xf32>
    %cst_29 = arith.constant 1.000000e+00 : f32
    %57 = vector.broadcast %cst_29 : f32 to vector<1x128xf32>
    %58 = arith.addf %57, %56 : vector<1x128xf32>
    %59 = arith.divf %57, %58 : vector<1x128xf32>
    %60 = vector.extract_strided_slice %38 {offsets = [0, 256], sizes = [1, 128], strides = [1, 1]} : vector<1x384xf32> to vector<1x128xf32>
    %61 = vector.extract_strided_slice %43 {offsets = [0, 256], sizes = [1, 128], strides = [1, 1]} : vector<1x384xf32> to vector<1x128xf32>
    %62 = arith.mulf %51, %61 : vector<1x128xf32>
    %63 = arith.addf %60, %62 : vector<1x128xf32>
    %64 = math.tanh %63 : vector<1x128xf32>
    %cst_30 = arith.constant 1.000000e+00 : f32
    %65 = vector.broadcast %cst_30 : f32 to vector<1x128xf32>
    %66 = arith.subf %65, %59 : vector<1x128xf32>
    %67 = arith.mulf %66, %64 : vector<1x128xf32>
    %68 = arith.mulf %59, %9 : vector<1x128xf32>
    %69 = arith.addf %67, %68 : vector<1x128xf32>
    %70 = vector.extract_strided_slice %69 {offsets = [0, 0], sizes = [1, 32], strides = [1, 1]} : vector<1x128xf32> to vector<1x32xf32>
    %c96 = arith.constant 96 : index
    %c0_31 = arith.constant 0 : index
    %71 = vector.load %arg7[%c96, %c0_31] : memref<160x384xf32, #tpu.memory_space<vmem>>, vector<32x384xf32>
    %cst_32 = arith.constant dense<0.000000e+00> : vector<1x384xf32>
    %72 = tpu.matmul %70, %71, %cst_32 {dimension_numbers = #tpu.dot_dimension_numbers<[1], [0], [0], [1], [0, 0, 1, 1], [], []>} : vector<1x32xf32>, vector<32x384xf32>, vector<1x384xf32> -> vector<1x384xf32>
    %c2 = arith.constant 2 : index
    %c0_33 = arith.constant 0 : index
    %73 = vector.load %arg8[%c2, %c0_33] : memref<4x384xf32, #tpu.memory_space<vmem>>, vector<1x384xf32>
    %74 = arith.addf %72, %73 : vector<1x384xf32>
    %75 = vector.extract_strided_slice %10 {offsets = [0, 0], sizes = [1, 32], strides = [1, 1]} : vector<1x128xf32> to vector<1x32xf32>
    %c128 = arith.constant 128 : index
    %c0_34 = arith.constant 0 : index
    %76 = vector.load %arg7[%c128, %c0_34] : memref<160x384xf32, #tpu.memory_space<vmem>>, vector<32x384xf32>
    %cst_35 = arith.constant dense<0.000000e+00> : vector<1x384xf32>
    %77 = tpu.matmul %75, %76, %cst_35 {dimension_numbers = #tpu.dot_dimension_numbers<[1], [0], [0], [1], [0, 0, 1, 1], [], []>} : vector<1x32xf32>, vector<32x384xf32>, vector<1x384xf32> -> vector<1x384xf32>
    %c3 = arith.constant 3 : index
    %c0_36 = arith.constant 0 : index
    %78 = vector.load %arg8[%c3, %c0_36] : memref<4x384xf32, #tpu.memory_space<vmem>>, vector<1x384xf32>
    %79 = arith.addf %77, %78 : vector<1x384xf32>
    %80 = vector.extract_strided_slice %74 {offsets = [0, 0], sizes = [1, 128], strides = [1, 1]} : vector<1x384xf32> to vector<1x128xf32>
    %81 = vector.extract_strided_slice %79 {offsets = [0, 0], sizes = [1, 128], strides = [1, 1]} : vector<1x384xf32> to vector<1x128xf32>
    %82 = arith.addf %80, %81 : vector<1x128xf32>
    %83 = arith.negf %82 : vector<1x128xf32>
    %84 = math.exp %83 : vector<1x128xf32>
    %cst_37 = arith.constant 1.000000e+00 : f32
    %85 = vector.broadcast %cst_37 : f32 to vector<1x128xf32>
    %86 = arith.addf %85, %84 : vector<1x128xf32>
    %87 = arith.divf %85, %86 : vector<1x128xf32>
    %88 = vector.extract_strided_slice %74 {offsets = [0, 128], sizes = [1, 128], strides = [1, 1]} : vector<1x384xf32> to vector<1x128xf32>
    %89 = vector.extract_strided_slice %79 {offsets = [0, 128], sizes = [1, 128], strides = [1, 1]} : vector<1x384xf32> to vector<1x128xf32>
    %90 = arith.addf %88, %89 : vector<1x128xf32>
    %91 = arith.negf %90 : vector<1x128xf32>
    %92 = math.exp %91 : vector<1x128xf32>
    %cst_38 = arith.constant 1.000000e+00 : f32
    %93 = vector.broadcast %cst_38 : f32 to vector<1x128xf32>
    %94 = arith.addf %93, %92 : vector<1x128xf32>
    %95 = arith.divf %93, %94 : vector<1x128xf32>
    %96 = vector.extract_strided_slice %74 {offsets = [0, 256], sizes = [1, 128], strides = [1, 1]} : vector<1x384xf32> to vector<1x128xf32>
    %97 = vector.extract_strided_slice %79 {offsets = [0, 256], sizes = [1, 128], strides = [1, 1]} : vector<1x384xf32> to vector<1x128xf32>
    %98 = arith.mulf %87, %97 : vector<1x128xf32>
    %99 = arith.addf %96, %98 : vector<1x128xf32>
    %100 = math.tanh %99 : vector<1x128xf32>
    %cst_39 = arith.constant 1.000000e+00 : f32
    %101 = vector.broadcast %cst_39 : f32 to vector<1x128xf32>
    %102 = arith.subf %101, %95 : vector<1x128xf32>
    %103 = arith.mulf %102, %100 : vector<1x128xf32>
    %104 = arith.mulf %95, %10 : vector<1x128xf32>
    %105 = arith.addf %103, %104 : vector<1x128xf32>
    %106 = vector.extract_strided_slice %105 {offsets = [0, 0], sizes = [1, 32], strides = [1, 1]} : vector<1x128xf32> to vector<1x32xf32>
    %c0_40 = arith.constant 0 : index
    %c0_41 = arith.constant 0 : index
    %107 = vector.load %arg9[%c0_40, %c0_41] : memref<65x128xf32, #tpu.memory_space<vmem>>, vector<32x128xf32>
    %cst_42 = arith.constant dense<0.000000e+00> : vector<1x128xf32>
    %108 = tpu.matmul %106, %107, %cst_42 {dimension_numbers = #tpu.dot_dimension_numbers<[1], [0], [0], [1], [0, 0, 1, 1], [], []>} : vector<1x32xf32>, vector<32x128xf32>, vector<1x128xf32> -> vector<1x128xf32>
    %c32_43 = arith.constant 32 : index
    %c0_44 = arith.constant 0 : index
    %109 = vector.load %arg9[%c32_43, %c0_44] : memref<65x128xf32, #tpu.memory_space<vmem>>, vector<32x128xf32>
    %cst_45 = arith.constant dense<0.000000e+00> : vector<1x128xf32>
    %110 = tpu.matmul %31, %109, %cst_45 {dimension_numbers = #tpu.dot_dimension_numbers<[1], [0], [0], [1], [0, 0, 1, 1], [], []>} : vector<1x32xf32>, vector<32x128xf32>, vector<1x128xf32> -> vector<1x128xf32>
    %111 = arith.addf %108, %110 : vector<1x128xf32>
    %c64_46 = arith.constant 64 : index
    %c0_47 = arith.constant 0 : index
    %112 = vector.load %arg9[%c64_46, %c0_47] : memref<65x128xf32, #tpu.memory_space<vmem>>, vector<1x128xf32>
    %113 = arith.addf %111, %112 : vector<1x128xf32>
    %c0_48 = arith.constant 0 : index
    %c0_49 = arith.constant 0 : index
    %114 = vector.load %arg13[%c0_48, %c0_49] : memref<1x128xf32, #tpu.memory_space<vmem>>, vector<1x128xf32>
    tpu.vector_store %arg13[%c0_48, %c0_49], %69 {strides = array<i32>} : memref<1x128xf32, #tpu.memory_space<vmem>>, vector<1x128xf32>,
    %c0_50 = arith.constant 0 : index
    %c0_51 = arith.constant 0 : index
    %115 = vector.load %arg14[%c0_50, %c0_51] : memref<1x128xf32, #tpu.memory_space<vmem>>, vector<1x128xf32>
    tpu.vector_store %arg14[%c0_50, %c0_51], %105 {strides = array<i32>} : memref<1x128xf32, #tpu.memory_space<vmem>>, vector<1x128xf32>,
    %116 = arith.index_cast %arg0 : i32 to index
    %c0_52 = arith.constant 0 : index
    %117 = vector.load %arg10[%116, %c0_52] : memref<8x128xf32, #tpu.memory_space<vmem>>, vector<1x128xf32>
    tpu.vector_store %arg10[%116, %c0_52], %113 {strides = array<i32>} : memref<8x128xf32, #tpu.memory_space<vmem>>, vector<1x128xf32>,
    %118 = arith.index_cast %arg0 : i32 to index
    %c0_53 = arith.constant 0 : index
    %119 = vector.load %arg12[%118, %c0_53] : memref<8x8xf32, #tpu.memory_space<vmem>>, vector<1x8xf32>
    tpu.vector_store %arg12[%118, %c0_53], %29 {strides = array<i32>} : memref<8x8xf32, #tpu.memory_space<vmem>>, vector<1x8xf32>,
    %c7_i32 = arith.constant 7 : i32
    %120 = arith.cmpi eq, %arg0, %c7_i32 : i32
    %121 = arith.extui %120 : i1 to i32
    %c0_i32_54 = arith.constant 0 : i32
    %122 = arith.cmpi ne, %121, %c0_i32_54 : i32
    scf.if %122 {
      %c0_55 = arith.constant 0 : index
      %c0_56 = arith.constant 0 : index
      %123 = vector.load %arg11[%c0_55, %c0_56] : memref<2x128xf32, #tpu.memory_space<vmem>>, vector<1x128xf32>
      tpu.vector_store %arg11[%c0_55, %c0_56], %69 {strides = array<i32>} : memref<2x128xf32, #tpu.memory_space<vmem>>, vector<1x128xf32>,
      %c1_57 = arith.constant 1 : index
      %c0_58 = arith.constant 0 : index
      %124 = vector.load %arg11[%c1_57, %c0_58] : memref<2x128xf32, #tpu.memory_space<vmem>>, vector<1x128xf32>
      tpu.vector_store %arg11[%c1_57, %c0_58], %105 {strides = array<i32>} : memref<2x128xf32, #tpu.memory_space<vmem>>, vector<1x128xf32>,
    } else {
    }
    return
  }
  func.func @transform_0(%arg0: i32, %arg1: memref<8xi32, #tpu.memory_space<smem>>) -> (i32, i32) {
    %c0_i32 = arith.constant 0 : i32
    %c0_i32_0 = arith.constant 0 : i32
    %c0_i32_1 = arith.constant 0 : i32
    return %c0_i32, %c0_i32_0 : i32, i32
  }
  func.func @transform_1(%arg0: i32, %arg1: memref<8xi32, #tpu.memory_space<smem>>) -> (i32, i32) {
    %c0_i32 = arith.constant 0 : i32
    %c0_i32_0 = arith.constant 0 : i32
    %c0_i32_1 = arith.constant 0 : i32
    return %c0_i32, %c0_i32_0 : i32, i32
  }
  func.func @transform_2(%arg0: i32, %arg1: memref<8xi32, #tpu.memory_space<smem>>) -> (i32, i32) {
    %c0_i32 = arith.constant 0 : i32
    %c0_i32_0 = arith.constant 0 : i32
    %c0_i32_1 = arith.constant 0 : i32
    return %c0_i32, %c0_i32_0 : i32, i32
  }
  func.func @transform_3(%arg0: i32, %arg1: memref<8xi32, #tpu.memory_space<smem>>) -> (i32, i32) {
    %c0_i32 = arith.constant 0 : i32
    %c0_i32_0 = arith.constant 0 : i32
    %c0_i32_1 = arith.constant 0 : i32
    return %c0_i32, %c0_i32_0 : i32, i32
  }
  func.func @transform_4(%arg0: i32, %arg1: memref<8xi32, #tpu.memory_space<smem>>) -> (i32, i32) {
    %c0_i32 = arith.constant 0 : i32
    %c0_i32_0 = arith.constant 0 : i32
    %c0_i32_1 = arith.constant 0 : i32
    return %c0_i32, %c0_i32_0 : i32, i32
  }
  func.func @transform_5(%arg0: i32, %arg1: memref<8xi32, #tpu.memory_space<smem>>) -> (i32, i32) {
    %c0_i32 = arith.constant 0 : i32
    %c0_i32_0 = arith.constant 0 : i32
    %c0_i32_1 = arith.constant 0 : i32
    return %c0_i32, %c0_i32_0 : i32, i32
  }
  func.func @transform_6(%arg0: i32, %arg1: memref<8xi32, #tpu.memory_space<smem>>) -> (i32, i32) {
    %c0_i32 = arith.constant 0 : i32
    %c0_i32_0 = arith.constant 0 : i32
    %c0_i32_1 = arith.constant 0 : i32
    return %c0_i32, %c0_i32_0 : i32, i32
  }
  func.func @transform_7(%arg0: i32, %arg1: memref<8xi32, #tpu.memory_space<smem>>) -> (i32, i32) {
    %c0_i32 = arith.constant 0 : i32
    %c0_i32_0 = arith.constant 0 : i32
    %c0_i32_1 = arith.constant 0 : i32
    return %c0_i32, %c0_i32_0 : i32, i32
  }
  func.func @transform_8(%arg0: i32, %arg1: memref<8xi32, #tpu.memory_space<smem>>) -> (i32, i32) {
    %c0_i32 = arith.constant 0 : i32
    %c0_i32_0 = arith.constant 0 : i32
    %c0_i32_1 = arith.constant 0 : i32
    return %c0_i32, %c0_i32_0 : i32, i32
  }
  func.func @transform_9(%arg0: i32, %arg1: memref<8xi32, #tpu.memory_space<smem>>) -> (i32, i32) {
    %c0_i32 = arith.constant 0 : i32
    %c0_i32_0 = arith.constant 0 : i32
    %c0_i32_1 = arith.constant 0 : i32
    return %c0_i32, %c0_i32_0 : i32, i32
  }
  func.func @transform_10(%arg0: i32, %arg1: memref<8xi32, #tpu.memory_space<smem>>) -> (i32, i32) {
    %c0_i32 = arith.constant 0 : i32
    %c0_i32_0 = arith.constant 0 : i32
    %c0_i32_1 = arith.constant 0 : i32
    return %c0_i32, %c0_i32_0 : i32, i32
  }
}

</mosaic_0001>

<llo_original>
// kernel: decoder_forward.1
$region0: #{decoder_forward.1}
  #allocation0 [shape = 'u32[]', space=smem, size = 0x4, offset = 0x4, fixed_abs, tag = 'smem constant byte address 0x4 - core index']
  #allocation1 [shape = 'u32[144,128]{1,0:T(1,128)}', space=vmem, size = 0x12000, scoped, tag = 'internal scratch']
  #allocation2 [shape = 'f32[1,128]{1,0:T(1,128)}', space=vmem, size = 0x200, scoped, tag = 'scratch operand']
  #allocation3 [shape = 'f32[1,128]{1,0:T(1,128)}', space=vmem, size = 0x200, scoped, tag = 'scratch operand']
  #allocation4 [shape = 's32[1]{0}', space=sflag, size = 0x4, scoped, tag = 'scoped memory for decoder_forward.1']
  #allocation5 [shape = 'u8[512]{0}', space=smem, size = 0x200, scoped, tag = 'prefetched SMEM operand 0']
  %s0 = inlined_call_operand.vmem [shape: s32[8], index: 0, kind: input, shape index: {}]
  %s1 = inlined_call_operand.vmem [shape: f32[64,32], index: 1, kind: input, shape index: {}]
  %s2 = inlined_call_operand.vmem [shape: f32[8,32], index: 2, kind: input, shape index: {}]
  %s3 = inlined_call_operand.vmem [shape: f32[8,32], index: 3, kind: input, shape index: {}]
  %s4 = inlined_call_operand.vmem [shape: f32[2,128], index: 4, kind: input, shape index: {}]
  %s5 = inlined_call_operand.vmem [shape: f32[33,32], index: 5, kind: input, shape index: {}]
  %s6 = inlined_call_operand.hbm [shape: f32[160,384], index: 6, kind: input, shape index: {}]
  %s7 = inlined_call_operand.vmem [shape: f32[4,384], index: 7, kind: input, shape index: {}]
  %s8 = inlined_call_operand.vmem [shape: f32[65,128], index: 8, kind: input, shape index: {}]
  %s9 = inlined_call_operand.hbm [shape: f32[8,128], index: 9, kind: output, shape index: {0}]
  %s10 = inlined_call_operand.hbm [shape: f32[2,128], index: 10, kind: output, shape index: {1}]
  %s11 = inlined_call_operand.hbm [shape: f32[8,8], index: 11, kind: output, shape index: {2}]
  %12 = xla_tuple %s9, %s10, %s11
  %s13 = sld [smem:[#allocation0]]
  $region93: #{decoder_forward.1} parent=0
    _
  %s15 = ssub.s32 1, %s13
  %s16 = scalar_select 0, %s15, %s13
  %s17 = sshll.u32 %s0, 4
  %s18 = int_to_ptr.vmem [resolvable:$true] %s17
  %20 = dma.vmem_to_smem %s18, 16, [#allocation5], [#allocation4]
  %21 = dma.done [#allocation4], 16
  %22 = sfence
  $region1: #{decoder_forward.1} parent=0
    #allocation6 [shape = 'u8[245760]{0}', space=vmem, size = 0x3c000, scoped, tag = 'input window, operand 6, single buffered']
    #allocation7 [shape = 's32[2]{0}', space=sflag, size = 0x8, scoped, tag = 'scoped memory for decoder_forward.1']
    #allocation8 [shape = 's32[2]{0}', space=sflag, size = 0x8, scoped, tag = 'scoped memory for decoder_forward.1']
    #allocation9 [shape = 'u8[4096]{0}', space=vmem, size = 0x1000, scoped, tag = 'output window, operand 0, single buffered']
    #allocation10 [shape = 'u8[1024]{0}', space=vmem, size = 0x400, scoped, tag = 'output window, operand 1, single buffered']
    #allocation11 [shape = 's32[1]{0}', space=sflag, size = 0x4, scoped, tag = 'scoped memory for decoder_forward.1']
    #allocation12 [shape = 'u8[4096]{0}', space=vmem, size = 0x1000, scoped, tag = 'output window, operand 2, single buffered']
    %23 = vsyncpa [#allocation7], 0
    %24 = vsyncpa [#allocation8], 0
    %25 = vsyncpa [#allocation11], 0
    loop: start=0, step=1, limit=10
    $region2: #{decoder_forward.1} parent=1 // loop_pre_header
      _
    $region3: #{decoder_forward.1} parent=1 // loop_header
      %s27 = sphi 0, %s31
      %p28 = scmp.ge.s32.totalorder %s27, 10
      %s35 = sphi 0, %s35
      %s37 = sphi 0, %s35
      %s38 = sphi 0, %s37
      %s52 = sphi 0, %s38
      %s56 = sphi 0, %s56
      %s58 = sphi 0, %s56
      %s59 = sphi 0, %s58
      %s73 = sphi 0, %s59
      %s77 = sphi 0, %s77
      %s79 = sphi 0, %s77
      %s80 = sphi 0, %s79
      %s94 = sphi 0, %s80
      %s98 = sphi 0, %s98
      %s100 = sphi 0, %s98
      %s101 = sphi 0, %s100
      %s115 = sphi 0, %s101
      %s119 = sphi 0, %s119
      %s121 = sphi 0, %s119
      %s122 = sphi 0, %s121
      %s136 = sphi 0, %s122
      %s140 = sphi 0, %s140
      %s142 = sphi 0, %s140
      %s143 = sphi 0, %s142
      %s157 = sphi 0, %s143
      %s161 = sphi 0, %s161
      %s163 = sphi 0, %s161
      %s164 = sphi 0, %s163
      %s178 = sphi 0, %s164
      %s182 = sphi 0, %s182
      %s184 = sphi 0, %s182
      %s185 = sphi 0, %s184
      %s199 = sphi 0, %s185
      %s203 = sphi 0, %s203
      %s205 = sphi 0, %s203
      %s206 = sphi 0, %s205
      %s220 = sphi 0, %s206
      %s224 = sphi 0, %s224
      %s226 = sphi 0, %s224
      %s227 = sphi 0, %s226
      %s241 = sphi 0, %s227
      %s245 = sphi 0, %s245
      %s247 = sphi 0, %s245
      %s248 = sphi 0, %s247
      %s262 = sphi 0, %s248
    $region4: #{decoder_forward.1} parent=1 // loop_header_branch
      %30 = sbr.rel (%p28) target = $region8
    $region5: #{decoder_forward.1} parent=1 // loop_body
      %s32 = ssub.s32 %s27, 1
      %s33 = ssub.s32 %s27, 2
      %s34 = sadd.s32 %s27, 1
      %s36 = sadd.s32 %s35, 1
      %p39 = scmp.eq.s32.totalorder %s27, 7
      %p40 = scmp.ne.s32.totalorder %s35, %s37
      %p41 = scmp.eq.s32.totalorder %s27, 0
      %p42 = por %p40, %p41
      %p43 = scmp.ne.s32.totalorder %s35, %s37
      %p44 = scmp.eq.s32.totalorder %s32, 7
      %p45 = por %p43, %p44
      %p46 = scmp.ne.s32.totalorder %s37, %s38
      %p47 = scmp.eq.s32.totalorder %s32, 0
      %p48 = por %p46, %p47
      %p49 = scmp.ne.s32.totalorder %s37, %s38
      %p50 = scmp.eq.s32.totalorder %s33, 7
      %p51 = por %p49, %p50
      %p53 = scmp.ne.s32.totalorder %s38, %s52
      %p54 = scmp.eq.s32.totalorder %s33, 0
      %p55 = por %p53, %p54
      %s57 = sadd.s32 %s56, 1
      %p60 = scmp.eq.s32.totalorder %s27, 7
      %p61 = scmp.ne.s32.totalorder %s56, %s58
      %p62 = scmp.eq.s32.totalorder %s27, 0
      %p63 = por %p61, %p62
      %p64 = scmp.ne.s32.totalorder %s56, %s58
      %p65 = scmp.eq.s32.totalorder %s32, 7
      %p66 = por %p64, %p65
      %p67 = scmp.ne.s32.totalorder %s58, %s59
      %p68 = scmp.eq.s32.totalorder %s32, 0
      %p69 = por %p67, %p68
      %p70 = scmp.ne.s32.totalorder %s58, %s59
      %p71 = scmp.eq.s32.totalorder %s33, 7
      %p72 = por %p70, %p71
      %p74 = scmp.ne.s32.totalorder %s59, %s73
      %p75 = scmp.eq.s32.totalorder %s33, 0
      %p76 = por %p74, %p75
      %s78 = sadd.s32 %s77, 1
      %p81 = scmp.eq.s32.totalorder %s27, 7
      %p82 = scmp.ne.s32.totalorder %s77, %s79
      %p83 = scmp.eq.s32.totalorder %s27, 0
      %p84 = por %p82, %p83
      %p85 = scmp.ne.s32.totalorder %s77, %s79
      %p86 = scmp.eq.s32.totalorder %s32, 7
      %p87 = por %p85, %p86
      %p88 = scmp.ne.s32.totalorder %s79, %s80
      %p89 = scmp.eq.s32.totalorder %s32, 0
      %p90 = por %p88, %p89
      %p91 = scmp.ne.s32.totalorder %s79, %s80
      %p92 = scmp.eq.s32.totalorder %s33, 7
      %p93 = por %p91, %p92
      %p95 = scmp.ne.s32.totalorder %s80, %s94
      %p96 = scmp.eq.s32.totalorder %s33, 0
      %p97 = por %p95, %p96
      %s99 = sadd.s32 %s98, 1
      %p102 = scmp.eq.s32.totalorder %s27, 7
      %p103 = scmp.ne.s32.totalorder %s98, %s100
      %p104 = scmp.eq.s32.totalorder %s27, 0
      %p105 = por %p103, %p104
      %p106 = scmp.ne.s32.totalorder %s98, %s100
      %p107 = scmp.eq.s32.totalorder %s32, 7
      %p108 = por %p106, %p107
      %p109 = scmp.ne.s32.totalorder %s100, %s101
      %p110 = scmp.eq.s32.totalorder %s32, 0
      %p111 = por %p109, %p110
      %p112 = scmp.ne.s32.totalorder %s100, %s101
      %p113 = scmp.eq.s32.totalorder %s33, 7
      %p114 = por %p112, %p113
      %p116 = scmp.ne.s32.totalorder %s101, %s115
      %p117 = scmp.eq.s32.totalorder %s33, 0
      %p118 = por %p116, %p117
      %s120 = sadd.s32 %s119, 1
      %p123 = scmp.eq.s32.totalorder %s27, 7
      %p124 = scmp.ne.s32.totalorder %s119, %s121
      %p125 = scmp.eq.s32.totalorder %s27, 0
      %p126 = por %p124, %p125
      %p127 = scmp.ne.s32.totalorder %s119, %s121
      %p128 = scmp.eq.s32.totalorder %s32, 7
      %p129 = por %p127, %p128
      %p130 = scmp.ne.s32.totalorder %s121, %s122
      %p131 = scmp.eq.s32.totalorder %s32, 0
      %p132 = por %p130, %p131
      %p133 = scmp.ne.s32.totalorder %s121, %s122
      %p134 = scmp.eq.s32.totalorder %s33, 7
      %p135 = por %p133, %p134
      %p137 = scmp.ne.s32.totalorder %s122, %s136
      %p138 = scmp.eq.s32.totalorder %s33, 0
      %p139 = por %p137, %p138
      %s141 = sadd.s32 %s140, 1
      %p144 = scmp.eq.s32.totalorder %s27, 7
      %p145 = scmp.ne.s32.totalorder %s140, %s142
      %p146 = scmp.eq.s32.totalorder %s27, 0
      %p147 = por %p145, %p146
      %p148 = scmp.ne.s32.totalorder %s140, %s142
      %p149 = scmp.eq.s32.totalorder %s32, 7
      %p150 = por %p148, %p149
      %p151 = scmp.ne.s32.totalorder %s142, %s143
      %p152 = scmp.eq.s32.totalorder %s32, 0
      %p153 = por %p151, %p152
      %p154 = scmp.ne.s32.totalorder %s142, %s143
      %p155 = scmp.eq.s32.totalorder %s33, 7
      %p156 = por %p154, %p155
      %p158 = scmp.ne.s32.totalorder %s143, %s157
      %p159 = scmp.eq.s32.totalorder %s33, 0
      %p160 = por %p158, %p159
      %s162 = sadd.s32 %s161, 1
      %p165 = scmp.eq.s32.totalorder %s27, 7
      %p166 = scmp.ne.s32.totalorder %s161, %s163
      %p167 = scmp.eq.s32.totalorder %s27, 0
      %p168 = por %p166, %p167
      %p169 = scmp.ne.s32.totalorder %s161, %s163
      %p170 = scmp.eq.s32.totalorder %s32, 7
      %p171 = por %p169, %p170
      %p172 = scmp.ne.s32.totalorder %s163, %s164
      %p173 = scmp.eq.s32.totalorder %s32, 0
      %p174 = por %p172, %p173
      %p175 = scmp.ne.s32.totalorder %s163, %s164
      %p176 = scmp.eq.s32.totalorder %s33, 7
      %p177 = por %p175, %p176
      %p179 = scmp.ne.s32.totalorder %s164, %s178
      %p180 = scmp.eq.s32.totalorder %s33, 0
      %p181 = por %p179, %p180
      %s183 = sadd.s32 %s182, 1
      %p186 = scmp.eq.s32.totalorder %s27, 7
      %p187 = scmp.ne.s32.totalorder %s182, %s184
      %p188 = scmp.eq.s32.totalorder %s27, 0
      %p189 = por %p187, %p188
      %p190 = scmp.ne.s32.totalorder %s182, %s184
      %p191 = scmp.eq.s32.totalorder %s32, 7
      %p192 = por %p190, %p191
      %p193 = scmp.ne.s32.totalorder %s184, %s185
      %p194 = scmp.eq.s32.totalorder %s32, 0
      %p195 = por %p193, %p194
      %p196 = scmp.ne.s32.totalorder %s184, %s185
      %p197 = scmp.eq.s32.totalorder %s33, 7
      %p198 = por %p196, %p197
      %p200 = scmp.ne.s32.totalorder %s185, %s199
      %p201 = scmp.eq.s32.totalorder %s33, 0
      %p202 = por %p200, %p201
      %s204 = sadd.s32 %s203, 1
      %p207 = scmp.eq.s32.totalorder %s27, 7
      %p208 = scmp.ne.s32.totalorder %s203, %s205
      %p209 = scmp.eq.s32.totalorder %s27, 0
      %p210 = por %p208, %p209
      %p211 = scmp.ne.s32.totalorder %s203, %s205
      %p212 = scmp.eq.s32.totalorder %s32, 7
      %p213 = por %p211, %p212
      %p214 = scmp.ne.s32.totalorder %s205, %s206
      %p215 = scmp.eq.s32.totalorder %s32, 0
      %p216 = por %p214, %p215
      %p217 = scmp.ne.s32.totalorder %s205, %s206
      %p218 = scmp.eq.s32.totalorder %s33, 7
      %p219 = por %p217, %p218
      %p221 = scmp.ne.s32.totalorder %s206, %s220
      %p222 = scmp.eq.s32.totalorder %s33, 0
      %p223 = por %p221, %p222
      %s225 = sadd.s32 %s224, 1
      %p228 = scmp.eq.s32.totalorder %s27, 7
      %p229 = scmp.ne.s32.totalorder %s224, %s226
      %p230 = scmp.eq.s32.totalorder %s27, 0
      %p231 = por %p229, %p230
      %p232 = scmp.ne.s32.totalorder %s224, %s226
      %p233 = scmp.eq.s32.totalorder %s32, 7
      %p234 = por %p232, %p233
      %p235 = scmp.ne.s32.totalorder %s226, %s227
      %p236 = scmp.eq.s32.totalorder %s32, 0
      %p237 = por %p235, %p236
      %p238 = scmp.ne.s32.totalorder %s226, %s227
      %p239 = scmp.eq.s32.totalorder %s33, 7
      %p240 = por %p238, %p239
      %p242 = scmp.ne.s32.totalorder %s227, %s241
      %p243 = scmp.eq.s32.totalorder %s33, 0
      %p244 = por %p242, %p243
      %s246 = sadd.s32 %s245, 1
      %p249 = scmp.eq.s32.totalorder %s27, 7
      %p250 = scmp.ne.s32.totalorder %s245, %s247
      %p251 = scmp.eq.s32.totalorder %s27, 0
      %p252 = por %p250, %p251
      %p253 = scmp.ne.s32.totalorder %s245, %s247
      %p254 = scmp.eq.s32.totalorder %s32, 7
      %p255 = por %p253, %p254
      %p256 = scmp.ne.s32.totalorder %s247, %s248
      %p257 = scmp.eq.s32.totalorder %s32, 0
      %p258 = por %p256, %p257
      %p259 = scmp.ne.s32.totalorder %s247, %s248
      %p260 = scmp.eq.s32.totalorder %s33, 7
      %p261 = por %p259, %p260
      %p263 = scmp.ne.s32.totalorder %s248, %s262
      %p264 = scmp.eq.s32.totalorder %s33, 0
      %p265 = por %p263, %p264
      %p266 = scmp.le.s32.totalorder 1, %s27
      %p267 = scmp.lt.s32.totalorder %s27, 9
      %p268 = pnand %p266, %p267
      %p269 = pneg %p268
      // Predicated region
      $region9: #{decoder_forward.1} parent=5 // pred_check
        _
      $region10: #{decoder_forward.1} parent=5 // pred_check_branch
        %271 = sbr.rel (%p268) target = $region12
      $region11: #{decoder_forward.1} parent=5 // pred_region
        %s272 = ssub.s32 %s27, 1
        // Predicated region
        $region13: #{decoder_forward.1} parent=11 // pred_check
          %p273 = pneg %p48
        $region14: #{decoder_forward.1} parent=11 // pred_check_branch
          %275 = sbr.rel (%p273) target = $region16
        $region15: #{decoder_forward.1} parent=11 // pred_region
          _
        $region16: #{decoder_forward.1} parent=11 // pred_fallthru
          _
        // Predicated region
        $region17: #{decoder_forward.1} parent=11 // pred_check
          %p276 = pneg %p69
        $region18: #{decoder_forward.1} parent=11 // pred_check_branch
          %278 = sbr.rel (%p276) target = $region20
        $region19: #{decoder_forward.1} parent=11 // pred_region
          _
        $region20: #{decoder_forward.1} parent=11 // pred_fallthru
          _
        // Predicated region
        $region21: #{decoder_forward.1} parent=11 // pred_check
          %p279 = pneg %p90
        $region22: #{decoder_forward.1} parent=11 // pred_check_branch
          %281 = sbr.rel (%p279) target = $region24
        $region23: #{decoder_forward.1} parent=11 // pred_region
          _
        $region24: #{decoder_forward.1} parent=11 // pred_fallthru
          _
        // Predicated region
        $region25: #{decoder_forward.1} parent=11 // pred_check
          %p282 = pneg %p111
        $region26: #{decoder_forward.1} parent=11 // pred_check_branch
          %284 = sbr.rel (%p282) target = $region28
        $region27: #{decoder_forward.1} parent=11 // pred_region
          _
        $region28: #{decoder_forward.1} parent=11 // pred_fallthru
          _
        // Predicated region
        $region29: #{decoder_forward.1} parent=11 // pred_check
          %p285 = pneg %p132
        $region30: #{decoder_forward.1} parent=11 // pred_check_branch
          %287 = sbr.rel (%p285) target = $region32
        $region31: #{decoder_forward.1} parent=11 // pred_region
          _
        $region32: #{decoder_forward.1} parent=11 // pred_fallthru
          _
        // Predicated region
        $region33: #{decoder_forward.1} parent=11 // pred_check
          %p288 = pneg %p153
        $region34: #{decoder_forward.1} parent=11 // pred_check_branch
          %290 = sbr.rel (%p288) target = $region36
        $region35: #{decoder_forward.1} parent=11 // pred_region
          %s292 = ssub.s32 7680, 7680
          %293 = vsyncadd [#allocation7], %s292
          %s294 = sshll.u32 [#allocation6], 4
          %s295 = int_to_ptr.vmem [resolvable:$true] %s294
          %300 = dma.hbm_to_vmem [thread:$0]  %s6, 7680, %s295, [#allocation7], 384, 384, 24
        $region36: #{decoder_forward.1} parent=11 // pred_fallthru
          _
        // Predicated region
        $region37: #{decoder_forward.1} parent=11 // pred_check
          %p301 = pneg %p174
        $region38: #{decoder_forward.1} parent=11 // pred_check_branch
          %303 = sbr.rel (%p301) target = $region40
        $region39: #{decoder_forward.1} parent=11 // pred_region
          _
        $region40: #{decoder_forward.1} parent=11 // pred_fallthru
          _
        // Predicated region
        $region41: #{decoder_forward.1} parent=11 // pred_check
          %p304 = pneg %p195
        $region42: #{decoder_forward.1} parent=11 // pred_check_branch
          %306 = sbr.rel (%p304) target = $region44
        $region43: #{decoder_forward.1} parent=11 // pred_region
          _
        $region44: #{decoder_forward.1} parent=11 // pred_fallthru
          _
      $region12: #{decoder_forward.1} parent=5 // pred_fallthru
        _
      %p307 = scmp.lt.s32.totalorder %s27, 8
      // Predicated region
      $region45: #{decoder_forward.1} parent=5 // pred_check
        %p308 = pneg %p307
      $region46: #{decoder_forward.1} parent=5 // pred_check_branch
        %310 = sbr.rel (%p308) target = $region48
      $region47: #{decoder_forward.1} parent=5 // pred_region
        _
      $region48: #{decoder_forward.1} parent=5 // pred_fallthru
        _
      %p311 = scmp.le.s32.totalorder 1, %s27
      %p312 = scmp.lt.s32.totalorder %s27, 9
      %p313 = pnand %p311, %p312
      %p314 = pneg %p313
      // Predicated region
      $region49: #{decoder_forward.1} parent=5 // pred_check
        _
      $region50: #{decoder_forward.1} parent=5 // pred_check_branch
        %316 = sbr.rel (%p313) target = $region52
      $region51: #{decoder_forward.1} parent=5 // pred_region
        %s317 = ssub.s32 %s27, 1
        // Predicated region
        $region53: #{decoder_forward.1} parent=51 // pred_check
          %p318 = pneg %p153
        $region54: #{decoder_forward.1} parent=51 // pred_check_branch
          %320 = sbr.rel (%p318) target = $region56
        $region55: #{decoder_forward.1} parent=51 // pred_region
          %321 = dma.done [#allocation7], 7680
        $region56: #{decoder_forward.1} parent=51 // pred_fallthru
          _
        %p322 = pneg %p48
        %p323 = pneg %p45
        %p324 = pneg %p69
        %p325 = pneg %p66
        %p326 = pneg %p90
        %p327 = pneg %p87
        %p328 = pneg %p111
        %p329 = pneg %p108
        %p330 = pneg %p132
        %p331 = pneg %p129
        %p332 = pneg %p153
        %p333 = pneg %p150
        %p334 = pneg %p174
        %p335 = pneg %p171
        %p336 = pneg %p195
        %p337 = pneg %p192
        %p338 = pneg %p216
        %p339 = pneg %p213
        %p340 = pneg %p237
        %p341 = pneg %p234
        %p342 = pneg %p258
        %p343 = pneg %p255
        %p344 = scmp.eq.s32.totalorder %s32, 0
        // Predicated region
        $region57: #{decoder_forward.1} parent=51 // pred_check
          %p345 = pneg %p344
        $region58: #{decoder_forward.1} parent=51 // pred_check_branch
          %347 = sbr.rel (%p345) target = $region60
        $region59: #{decoder_forward.1} parent=51 // pred_region
          %v348 = vld [vmem:[%s4] sm:$0x1]
          %349 = vst [vmem:[#allocation2] sm:$0x1] %v348
          %v350 = vld [vmem:[%s4 + $0x1] sm:$0x1]
          %351 = vst [vmem:[#allocation3] sm:$0x1] %v350
        $region60: #{decoder_forward.1} parent=51 // pred_fallthru
          _
        %s352 = sld [smem:[#allocation5 + %s32]]
        %p353 = scmp.gt.s32.totalorder %s352, 0
        %s354 = scalar_select %p353, %s352, 0
        %p355 = scmp.lt.s32.totalorder %s354, 63
        %s356 = scalar_select %p355, %s354, 63
        %s357 = scalar_lea.vmem %s1, %s356
        %v358 = vld [vmem:[%s357] sm:$0x1]
        %v359 = vld [vmem:[#allocation2] sm:$0x1]
        %v360 = vld [vmem:[#allocation3] sm:$0x1]
        %v361 = vld [vmem:[%s5] sm:$0xff]
        %v362 = vld [vmem:[%s5 + $0x8] sm:$0xff]
        %v363 = vld [vmem:[%s5 + $0x10] sm:$0xff]
        %v364 = vld [vmem:[%s5 + $0x18] sm:$0xff]
        %vm365 = vcmask 261120
        %v367 = vsel %vm365, %v360, 0
        %369 = vmatprep.subr.mxu0 0.0
        %370 = vmatpush1.msra.mxu0 0.0
        %371 = vmatprep.subr.mxu0 0.0
        %372 = vmatpush1.msra.mxu0 0.0
        %373 = vmatprep.subr.mxu0 0.0
        %374 = vmatpush1.msra.mxu0 0.0
        %375 = vmatprep.subr.mxu0 0.0
        %376 = vmatpush1.msra.mxu0 0.0
        %377 = vmatprep.subr.mxu0 0.0
        %378 = vmatpush1.msra.mxu0 0.0
        %379 = vmatprep.subr.mxu0 0.0
        %380 = vmatpush1.msra.mxu0 0.0
        %381 = vmatprep.subr.mxu0 0.0
        %382 = vmatpush1.msra.mxu0 0.0
        %383 = vmatprep.subr.mxu0 0.0
        %384 = vmatpush1.msra.mxu0 0.0
        %385 = vmatprep.subr.mxu0 0.0
        %386 = vmatpush1.msra.mxu0 0.0
        %387 = vmatprep.subr.mxu0 0.0
        %388 = vmatpush1.msra.mxu0 0.0
        %389 = vmatprep.subr.mxu0 0.0
        %390 = vmatpush1.msra.mxu0 0.0
        %391 = vmatprep.subr.mxu0 0.0
        %392 = vmatpush1.msra.mxu0 0.0
        %393 = vmatprep.subr.mxu0 0.0
        %394 = vmatpush1.msra.mxu0 %v364
        %395 = vmatprep.subr.mxu0 0.0
        %396 = vmatpush1.msra.mxu0 %v363
        %397 = vmatprep.subr.mxu0 0.0
        %398 = vmatpush1.msra.mxu0 %v362
        %399 = vmatprep.subr.mxu0 0.0
        %400 = vmatpush1.msra.mxu0 %v361
        %401 = vmatprep.subr.mxu0 0.0
        %402 = vmatpush2.msra.mxu0 0.0
        %403 = vmatprep.subr.mxu0 0.0
        %404 = vmatpush2.msra.mxu0 0.0
        %405 = vmatprep.subr.mxu0 0.0
        %406 = vmatpush2.msra.mxu0 0.0
        %407 = vmatprep.subr.mxu0 0.0
        %408 = vmatpush2.msra.mxu0 0.0
        %409 = vmatprep.subr.mxu0 0.0
        %410 = vmatpush2.msra.mxu0 0.0
        %411 = vmatprep.subr.mxu0 0.0
        %412 = vmatpush2.msra.mxu0 0.0
        %413 = vmatprep.subr.mxu0 0.0
        %414 = vmatpush2.msra.mxu0 0.0
        %415 = vmatprep.subr.mxu0 0.0
        %416 = vmatpush2.msra.mxu0 0.0
        %417 = vmatprep.subr.mxu0 0.0
        %418 = vmatpush2.msra.mxu0 0.0
        %419 = vmatprep.subr.mxu0 0.0
        %420 = vmatpush2.msra.mxu0 0.0
        %421 = vmatprep.subr.mxu0 0.0
        %422 = vmatpush2.msra.mxu0 0.0
        %423 = vmatprep.subr.mxu0 0.0
        %424 = vmatpush2.msra.mxu0 0.0
        %425 = vmatprep.subr.mxu0 0.0
        %426 = vmatpush2.msra.mxu0 0.0
        %427 = vmatprep.subr.mxu0 0.0
        %428 = vmatpush2.msra.mxu0 0.0
        %429 = vmatprep.subr.mxu0 0.0
        %430 = vmatpush2.msra.mxu0 0.0
        %431 = vmatprep.subr.mxu0 0.0
        %432 = vmatpush2.msra.mxu0 0.0
        %433 = vmatprep.mubr.f32.mxu0 0.0
        %434 = vmatmul.mubr.f32.gmra.mxu0 %v367
        %v435 = vpop.f32.mrf.mxu0
        %v436 = vadd.f32 0.0, %v435
        %v437 = vpop.f32.mrf.mxu0
        %438 = vdwg.mxu0
        %v439 = vld [vmem:[%s3] sm:$0xff]
        %v440 = vlaneseq
        %v441 = vshrl.u32 %v440, 7
        %v442 = vsub.s32 0, %v441
        %v443 = vrot.slane %v436, %v442
        %v444 = vadd.f32 %v439, %v443
        %v445 = vtanh.pop %v444
        %v446 = vld [vmem:[%s5 + $0x20] sm:$0x1]
        %v448 = vsel %vm365, %v446, 0
        %v451 = vsel %vm365, %v445, 0
        %453 = vmatprep.subr.mxu0 0.0
        %454 = vmatpush1.xpose.msra.mxu0 0.0
        %455 = vmatprep.subr.mxu0 0.0
        %456 = vmatpush1.xpose.msra.mxu0 0.0
        %457 = vmatprep.subr.mxu0 0.0
        %458 = vmatpush1.xpose.msra.mxu0 0.0
        %459 = vmatprep.subr.mxu0 0.0
        %460 = vmatpush1.xpose.msra.mxu0 0.0
        %461 = vmatprep.subr.mxu0 0.0
        %462 = vmatpush1.xpose.msra.mxu0 0.0
        %463 = vmatprep.subr.mxu0 0.0
        %464 = vmatpush1.xpose.msra.mxu0 0.0
        %465 = vmatprep.subr.mxu0 0.0
        %466 = vmatpush1.xpose.msra.mxu0 0.0
        %467 = vmatprep.subr.mxu0 0.0
        %468 = vmatpush1.xpose.msra.mxu0 0.0
        %469 = vmatprep.subr.mxu0 0.0
        %470 = vmatpush1.xpose.msra.mxu0 0.0
        %471 = vmatprep.subr.mxu0 0.0
        %472 = vmatpush1.xpose.msra.mxu0 0.0
        %473 = vmatprep.subr.mxu0 0.0
        %474 = vmatpush1.xpose.msra.mxu0 0.0
        %475 = vmatprep.subr.mxu0 0.0
        %476 = vmatpush1.xpose.msra.mxu0 0.0
        %477 = vmatprep.subr.mxu0 0.0
        %478 = vmatpush1.xpose.msra.mxu0 0.0
        %479 = vmatprep.subr.mxu0 0.0
        %480 = vmatpush1.xpose.msra.mxu0 0.0
        %481 = vmatprep.subr.mxu0 0.0
        %482 = vmatpush1.xpose.msra.mxu0 0.0
        %483 = vmatprep.subr.mxu0 0.0
        %484 = vmatpush1.xpose.msra.mxu0 %v451
        %485 = vmatprep.subr.mxu0 0.0
        %486 = vmatpush2.xpose.msra.mxu0 0.0
        %487 = vmatprep.subr.mxu0 0.0
        %488 = vmatpush2.xpose.msra.mxu0 0.0
        %489 = vmatprep.subr.mxu0 0.0
        %490 = vmatpush2.xpose.msra.mxu0 0.0
        %491 = vmatprep.subr.mxu0 0.0
        %492 = vmatpush2.xpose.msra.mxu0 0.0
        %493 = vmatprep.subr.mxu0 0.0
        %494 = vmatpush2.xpose.msra.mxu0 0.0
        %495 = vmatprep.subr.mxu0 0.0
        %496 = vmatpush2.xpose.msra.mxu0 0.0
        %497 = vmatprep.subr.mxu0 0.0
        %498 = vmatpush2.xpose.msra.mxu0 0.0
        %499 = vmatprep.subr.mxu0 0.0
        %500 = vmatpush2.xpose.msra.mxu0 0.0
        %501 = vmatprep.subr.mxu0 0.0
        %502 = vmatpush2.xpose.msra.mxu0 0.0
        %503 = vmatprep.subr.mxu0 0.0
        %504 = vmatpush2.xpose.msra.mxu0 0.0
        %505 = vmatprep.subr.mxu0 0.0
        %506 = vmatpush2.xpose.msra.mxu0 0.0
        %507 = vmatprep.subr.mxu0 0.0
        %508 = vmatpush2.xpose.msra.mxu0 0.0
        %509 = vmatprep.subr.mxu0 0.0
        %510 = vmatpush2.xpose.msra.mxu0 0.0
        %511 = vmatprep.subr.mxu0 0.0
        %512 = vmatpush2.xpose.msra.mxu0 0.0
        %513 = vmatprep.subr.mxu0 0.0
        %514 = vmatpush2.xpose.msra.mxu0 0.0
        %515 = vmatprep.subr.mxu0 0.0
        %516 = vmatpush2.xpose.msra.mxu0 0.0
        %517 = vmatprep.mubr.f32.mxu0 0.0
        %518 = vmatmul.mubr.f32.gmra.mxu0 %v448
        %v519 = vpop.f32.mrf.mxu0
        %v520 = vadd.f32 0.0, %v519
        %v521 = vpop.f32.mrf.mxu0
        %522 = vdwg.mxu0
        %vm523 = vcmask 57344
        %v524 = vsel %vm523, %v520, -inf
        %525 = vmax.xlane.f32.xlu0 %v524
        %v526 = vpop.xlane.xlu0 %525
        %v527 = vsub.f32 %v520, %v526
        %v528 = vmul.f32 %v527, 1.442695
        %v529 = vpow.pop %v528
        %v530 = vsel %vm523, %v529, 0.0
        %531 = vadd.xlane.f32.xlu0 %v530
        %v532 = vpop.xlane.xlu0 %531
        %v533 = vrcp.pop %v532
        %v534 = vmul.f32 %v529, %v533
        %v535 = vld [vmem:[%s2] sm:$0xff]
        %vm536 = vcmask 64512
        %v538 = vsel %vm536, %v534, 0
        %540 = vmatprep.subr.mxu0 0.0
        %541 = vmatpush1.msra.mxu0 0.0
        %542 = vmatprep.subr.mxu0 0.0
        %543 = vmatpush1.msra.mxu0 0.0
        %544 = vmatprep.subr.mxu0 0.0
        %545 = vmatpush1.msra.mxu0 0.0
        %546 = vmatprep.subr.mxu0 0.0
        %547 = vmatpush1.msra.mxu0 0.0
        %548 = vmatprep.subr.mxu0 0.0
        %549 = vmatpush1.msra.mxu0 0.0
        %550 = vmatprep.subr.mxu0 0.0
        %551 = vmatpush1.msra.mxu0 0.0
        %552 = vmatprep.subr.mxu0 0.0
        %553 = vmatpush1.msra.mxu0 0.0
        %554 = vmatprep.subr.mxu0 0.0
        %555 = vmatpush1.msra.mxu0 0.0
        %556 = vmatprep.subr.mxu0 0.0
        %557 = vmatpush1.msra.mxu0 0.0
        %558 = vmatprep.subr.mxu0 0.0
        %559 = vmatpush1.msra.mxu0 0.0
        %560 = vmatprep.subr.mxu0 0.0
        %561 = vmatpush1.msra.mxu0 0.0
        %562 = vmatprep.subr.mxu0 0.0
        %563 = vmatpush1.msra.mxu0 0.0
        %564 = vmatprep.subr.mxu0 0.0
        %565 = vmatpush1.msra.mxu0 0.0
        %566 = vmatprep.subr.mxu0 0.0
        %567 = vmatpush1.msra.mxu0 0.0
        %568 = vmatprep.subr.mxu0 0.0
        %569 = vmatpush1.msra.mxu0 0.0
        %570 = vmatprep.subr.mxu0 0.0
        %571 = vmatpush1.msra.mxu0 %v535
        %572 = vmatprep.subr.mxu0 0.0
        %573 = vmatpush2.msra.mxu0 0.0
        %574 = vmatprep.subr.mxu0 0.0
        %575 = vmatpush2.msra.mxu0 0.0
        %576 = vmatprep.subr.mxu0 0.0
        %577 = vmatpush2.msra.mxu0 0.0
        %578 = vmatprep.subr.mxu0 0.0
        %579 = vmatpush2.msra.mxu0 0.0
        %580 = vmatprep.subr.mxu0 0.0
        %581 = vmatpush2.msra.mxu0 0.0
        %582 = vmatprep.subr.mxu0 0.0
        %583 = vmatpush2.msra.mxu0 0.0
        %584 = vmatprep.subr.mxu0 0.0
        %585 = vmatpush2.msra.mxu0 0.0
        %586 = vmatprep.subr.mxu0 0.0
        %587 = vmatpush2.msra.mxu0 0.0
        %588 = vmatprep.subr.mxu0 0.0
        %589 = vmatpush2.msra.mxu0 0.0
        %590 = vmatprep.subr.mxu0 0.0
        %591 = vmatpush2.msra.mxu0 0.0
        %592 = vmatprep.subr.mxu0 0.0
        %593 = vmatpush2.msra.mxu0 0.0
        %594 = vmatprep.subr.mxu0 0.0
        %595 = vmatpush2.msra.mxu0 0.0
        %596 = vmatprep.subr.mxu0 0.0
        %597 = vmatpush2.msra.mxu0 0.0
        %598 = vmatprep.subr.mxu0 0.0
        %599 = vmatpush2.msra.mxu0 0.0
        %600 = vmatprep.subr.mxu0 0.0
        %601 = vmatpush2.msra.mxu0 0.0
        %602 = vmatprep.subr.mxu0 0.0
        %603 = vmatpush2.msra.mxu0 0.0
        %604 = vmatprep.mubr.f32.mxu0 0.0
        %605 = vmatmul.mubr.f32.gmra.mxu0 %v538
        %v606 = vpop.f32.mrf.mxu0
        %v607 = vadd.f32 0.0, %v606
        %v608 = vpop.f32.mrf.mxu0
        %609 = vdwg.mxu0
        %v610 = vld [vmem:[#allocation6] sm:$0xff]
        %v611 = vld [vmem:[#allocation6 + $0x8] sm:$0xff]
        %v612 = vld [vmem:[#allocation6 + $0x10] sm:$0xff]
        %v613 = vld [vmem:[#allocation6 + $0x18] sm:$0xff]
        %v614 = vld [vmem:[#allocation6 + $0x20] sm:$0xff]
        %v615 = vld [vmem:[#allocation6 + $0x28] sm:$0xff]
        %v616 = vld [vmem:[#allocation6 + $0x30] sm:$0xff]
        %v617 = vld [vmem:[#allocation6 + $0x38] sm:$0xff]
        %v618 = vld [vmem:[#allocation6 + $0x40] sm:$0xff]
        %v619 = vld [vmem:[#allocation6 + $0x48] sm:$0xff]
        %v620 = vld [vmem:[#allocation6 + $0x50] sm:$0xff]
        %v621 = vld [vmem:[#allocation6 + $0x58] sm:$0xff]
        %v622 = vld [vmem:[#allocation6 + $0x60] sm:$0xff]
        %v623 = vld [vmem:[#allocation6 + $0x68] sm:$0xff]
        %v624 = vld [vmem:[#allocation6 + $0x70] sm:$0xff]
        %v625 = vld [vmem:[#allocation6 + $0x78] sm:$0xff]
        %v626 = vld [vmem:[#allocation6 + $0x80] sm:$0xff]
        %v627 = vld [vmem:[#allocation6 + $0x88] sm:$0xff]
        %v628 = vld [vmem:[#allocation6 + $0x90] sm:$0xff]
        %v629 = vld [vmem:[#allocation6 + $0x98] sm:$0xff]
        %v630 = vld [vmem:[#allocation6 + $0xa0] sm:$0xff]
        %v631 = vld [vmem:[#allocation6 + $0xa8] sm:$0xff]
        %v632 = vld [vmem:[#allocation6 + $0xb0] sm:$0xff]
        %v633 = vld [vmem:[#allocation6 + $0xb8] sm:$0xff]
        %v635 = vsel %vm365, %v607, 0
        %637 = vmatprep.subr.mxu0 0.0
        %638 = vmatpush1.msra.mxu0 0.0
        %639 = vmatprep.subr.mxu0 0.0
        %640 = vmatpush1.msra.mxu0 0.0
        %641 = vmatprep.subr.mxu0 0.0
        %642 = vmatpush1.msra.mxu0 0.0
        %643 = vmatprep.subr.mxu0 0.0
        %644 = vmatpush1.msra.mxu0 0.0
        %645 = vmatprep.subr.mxu0 0.0
        %646 = vmatpush1.msra.mxu0 0.0
        %647 = vmatprep.subr.mxu0 0.0
        %648 = vmatpush1.msra.mxu0 0.0
        %649 = vmatprep.subr.mxu0 0.0
        %650 = vmatpush1.msra.mxu0 0.0
        %651 = vmatprep.subr.mxu0 0.0
        %652 = vmatpush1.msra.mxu0 0.0
        %653 = vmatprep.subr.mxu0 0.0
        %654 = vmatpush1.msra.mxu0 0.0
        %655 = vmatprep.subr.mxu0 0.0
        %656 = vmatpush1.msra.mxu0 0.0
        %657 = vmatprep.subr.mxu0 0.0
        %658 = vmatpush1.msra.mxu0 0.0
        %659 = vmatprep.subr.mxu0 0.0
        %660 = vmatpush1.msra.mxu0 0.0
        %661 = vmatprep.subr.mxu0 %v632
        %662 = vmatpush1.msra.mxu0 %v631
        %663 = vmatprep.subr.mxu0 %v629
        %664 = vmatpush1.msra.mxu0 %v628
        %665 = vmatprep.subr.mxu0 %v626
        %666 = vmatpush1.msra.mxu0 %v625
        %667 = vmatprep.subr.mxu0 %v623
        %668 = vmatpush1.msra.mxu0 %v622
        %669 = vmatprep.subr.mxu0 0.0
        %670 = vmatpush2.msra.mxu0 0.0
        %671 = vmatprep.subr.mxu0 0.0
        %672 = vmatpush2.msra.mxu0 0.0
        %673 = vmatprep.subr.mxu0 0.0
        %674 = vmatpush2.msra.mxu0 0.0
        %675 = vmatprep.subr.mxu0 0.0
        %676 = vmatpush2.msra.mxu0 0.0
        %677 = vmatprep.subr.mxu0 0.0
        %678 = vmatpush2.msra.mxu0 0.0
        %679 = vmatprep.subr.mxu0 0.0
        %680 = vmatpush2.msra.mxu0 0.0
        %681 = vmatprep.subr.mxu0 0.0
        %682 = vmatpush2.msra.mxu0 0.0
        %683 = vmatprep.subr.mxu0 0.0
        %684 = vmatpush2.msra.mxu0 0.0
        %685 = vmatprep.subr.mxu0 0.0
        %686 = vmatpush2.msra.mxu0 0.0
        %687 = vmatprep.subr.mxu0 0.0
        %688 = vmatpush2.msra.mxu0 0.0
        %689 = vmatprep.subr.mxu0 0.0
        %690 = vmatpush2.msra.mxu0 0.0
        %691 = vmatprep.subr.mxu0 0.0
        %692 = vmatpush2.msra.mxu0 0.0
        %693 = vmatprep.subr.mxu0 0.0
        %694 = vmatpush2.msra.mxu0 0.0
        %695 = vmatprep.subr.mxu0 0.0
        %696 = vmatpush2.msra.mxu0 0.0
        %697 = vmatprep.subr.mxu0 0.0
        %698 = vmatpush2.msra.mxu0 0.0
        %699 = vmatprep.subr.mxu0 0.0
        %700 = vmatpush2.msra.mxu0 0.0
        %701 = vmatprep.mubr.f32.mxu0 0.0
        %702 = vmatmul.mubr.f32.gmra.mxu0 %v635
        %v703 = vpop.f32.mrf.mxu0
        %v704 = vadd.f32 0.0, %v703
        %v705 = vpop.f32.mrf.mxu0
        %v706 = vadd.f32 0.0, %v705
        %707 = vdwg.mxu0
        %708 = vmatprep.subr.mxu0 0.0
        %709 = vmatpush1.msra.mxu0 0.0
        %710 = vmatprep.subr.mxu0 0.0
        %711 = vmatpush1.msra.mxu0 0.0
        %712 = vmatprep.subr.mxu0 0.0
        %713 = vmatpush1.msra.mxu0 0.0
        %714 = vmatprep.subr.mxu0 0.0
        %715 = vmatpush1.msra.mxu0 0.0
        %716 = vmatprep.subr.mxu0 0.0
        %717 = vmatpush1.msra.mxu0 0.0
        %718 = vmatprep.subr.mxu0 0.0
        %719 = vmatpush1.msra.mxu0 0.0
        %720 = vmatprep.subr.mxu0 0.0
        %721 = vmatpush1.msra.mxu0 0.0
        %722 = vmatprep.subr.mxu0 0.0
        %723 = vmatpush1.msra.mxu0 0.0
        %724 = vmatprep.subr.mxu0 0.0
        %725 = vmatpush1.msra.mxu0 0.0
        %726 = vmatprep.subr.mxu0 0.0
        %727 = vmatpush1.msra.mxu0 0.0
        %728 = vmatprep.subr.mxu0 0.0
        %729 = vmatpush1.msra.mxu0 0.0
        %730 = vmatprep.subr.mxu0 0.0
        %731 = vmatpush1.msra.mxu0 0.0
        %732 = vmatprep.subr.mxu0 0.0
        %733 = vmatpush1.msra.mxu0 %v633
        %734 = vmatprep.subr.mxu0 0.0
        %735 = vmatpush1.msra.mxu0 %v630
        %736 = vmatprep.subr.mxu0 0.0
        %737 = vmatpush1.msra.mxu0 %v627
        %738 = vmatprep.subr.mxu0 0.0
        %739 = vmatpush1.msra.mxu0 %v624
        %740 = vmatprep.subr.mxu0 0.0
        %741 = vmatpush2.msra.mxu0 0.0
        %742 = vmatprep.subr.mxu0 0.0
        %743 = vmatpush2.msra.mxu0 0.0
        %744 = vmatprep.subr.mxu0 0.0
        %745 = vmatpush2.msra.mxu0 0.0
        %746 = vmatprep.subr.mxu0 0.0
        %747 = vmatpush2.msra.mxu0 0.0
        %748 = vmatprep.subr.mxu0 0.0
        %749 = vmatpush2.msra.mxu0 0.0
        %750 = vmatprep.subr.mxu0 0.0
        %751 = vmatpush2.msra.mxu0 0.0
        %752 = vmatprep.subr.mxu0 0.0
        %753 = vmatpush2.msra.mxu0 0.0
        %754 = vmatprep.subr.mxu0 0.0
        %755 = vmatpush2.msra.mxu0 0.0
        %756 = vmatprep.subr.mxu0 0.0
        %757 = vmatpush2.msra.mxu0 0.0
        %758 = vmatprep.subr.mxu0 0.0
        %759 = vmatpush2.msra.mxu0 0.0
        %760 = vmatprep.subr.mxu0 0.0
        %761 = vmatpush2.msra.mxu0 0.0
        %762 = vmatprep.subr.mxu0 0.0
        %763 = vmatpush2.msra.mxu0 0.0
        %764 = vmatprep.subr.mxu0 0.0
        %765 = vmatpush2.msra.mxu0 0.0
        %766 = vmatprep.subr.mxu0 0.0
        %767 = vmatpush2.msra.mxu0 0.0
        %768 = vmatprep.subr.mxu0 0.0
        %769 = vmatpush2.msra.mxu0 0.0
        %770 = vmatprep.subr.mxu0 0.0
        %771 = vmatpush2.msra.mxu0 0.0
        %772 = vmatprep.mubr.f32.mxu0 0.0
        %773 = vmatmul.mubr.f32.gmra.mxu0 %v635
        %v774 = vpop.f32.mrf.mxu0
        %v775 = vadd.f32 0.0, %v774
        %v776 = vpop.f32.mrf.mxu0
        %777 = vdwg.mxu0
        %v779 = vsel %vm365, %v358, 0
        %781 = vmatprep.subr.mxu0 0.0
        %782 = vmatpush1.msra.mxu0 0.0
        %783 = vmatprep.subr.mxu0 0.0
        %784 = vmatpush1.msra.mxu0 0.0
        %785 = vmatprep.subr.mxu0 0.0
        %786 = vmatpush1.msra.mxu0 0.0
        %787 = vmatprep.subr.mxu0 0.0
        %788 = vmatpush1.msra.mxu0 0.0
        %789 = vmatprep.subr.mxu0 0.0
        %790 = vmatpush1.msra.mxu0 0.0
        %791 = vmatprep.subr.mxu0 0.0
        %792 = vmatpush1.msra.mxu0 0.0
        %793 = vmatprep.subr.mxu0 0.0
        %794 = vmatpush1.msra.mxu0 0.0
        %795 = vmatprep.subr.mxu0 0.0
        %796 = vmatpush1.msra.mxu0 0.0
        %797 = vmatprep.subr.mxu0 0.0
        %798 = vmatpush1.msra.mxu0 0.0
        %799 = vmatprep.subr.mxu0 0.0
        %800 = vmatpush1.msra.mxu0 0.0
        %801 = vmatprep.subr.mxu0 0.0
        %802 = vmatpush1.msra.mxu0 0.0
        %803 = vmatprep.subr.mxu0 0.0
        %804 = vmatpush1.msra.mxu0 0.0
        %805 = vmatprep.subr.mxu0 %v620
        %806 = vmatpush1.msra.mxu0 %v619
        %807 = vmatprep.subr.mxu0 %v617
        %808 = vmatpush1.msra.mxu0 %v616
        %809 = vmatprep.subr.mxu0 %v614
        %810 = vmatpush1.msra.mxu0 %v613
        %811 = vmatprep.subr.mxu0 %v611
        %812 = vmatpush1.msra.mxu0 %v610
        %813 = vmatprep.subr.mxu0 0.0
        %814 = vmatpush2.msra.mxu0 0.0
        %815 = vmatprep.subr.mxu0 0.0
        %816 = vmatpush2.msra.mxu0 0.0
        %817 = vmatprep.subr.mxu0 0.0
        %818 = vmatpush2.msra.mxu0 0.0
        %819 = vmatprep.subr.mxu0 0.0
        %820 = vmatpush2.msra.mxu0 0.0
        %821 = vmatprep.subr.mxu0 0.0
        %822 = vmatpush2.msra.mxu0 0.0
        %823 = vmatprep.subr.mxu0 0.0
        %824 = vmatpush2.msra.mxu0 0.0
        %825 = vmatprep.subr.mxu0 0.0
        %826 = vmatpush2.msra.mxu0 0.0
        %827 = vmatprep.subr.mxu0 0.0
        %828 = vmatpush2.msra.mxu0 0.0
        %829 = vmatprep.subr.mxu0 0.0
        %830 = vmatpush2.msra.mxu0 0.0
        %831 = vmatprep.subr.mxu0 0.0
        %832 = vmatpush2.msra.mxu0 0.0
        %833 = vmatprep.subr.mxu0 0.0
        %834 = vmatpush2.msra.mxu0 0.0
        %835 = vmatprep.subr.mxu0 0.0
        %836 = vmatpush2.msra.mxu0 0.0
        %837 = vmatprep.subr.mxu0 0.0
        %838 = vmatpush2.msra.mxu0 0.0
        %839 = vmatprep.subr.mxu0 0.0
        %840 = vmatpush2.msra.mxu0 0.0
        %841 = vmatprep.subr.mxu0 0.0
        %842 = vmatpush2.msra.mxu0 0.0
        %843 = vmatprep.subr.mxu0 0.0
        %844 = vmatpush2.msra.mxu0 0.0
        %845 = vmatprep.mubr.f32.mxu0 0.0
        %846 = vmatmul.mubr.f32.gmra.mxu0 %v779
        %v847 = vpop.f32.mrf.mxu0
        %v848 = vadd.f32 %v704, %v847
        %v849 = vpop.f32.mrf.mxu0
        %v850 = vadd.f32 %v706, %v849
        %851 = vdwg.mxu0
        %852 = vmatprep.subr.mxu0 0.0
        %853 = vmatpush1.msra.mxu0 0.0
        %854 = vmatprep.subr.mxu0 0.0
        %855 = vmatpush1.msra.mxu0 0.0
        %856 = vmatprep.subr.mxu0 0.0
        %857 = vmatpush1.msra.mxu0 0.0
        %858 = vmatprep.subr.mxu0 0.0
        %859 = vmatpush1.msra.mxu0 0.0
        %860 = vmatprep.subr.mxu0 0.0
        %861 = vmatpush1.msra.mxu0 0.0
        %862 = vmatprep.subr.mxu0 0.0
        %863 = vmatpush1.msra.mxu0 0.0
        %864 = vmatprep.subr.mxu0 0.0
        %865 = vmatpush1.msra.mxu0 0.0
        %866 = vmatprep.subr.mxu0 0.0
        %867 = vmatpush1.msra.mxu0 0.0
        %868 = vmatprep.subr.mxu0 0.0
        %869 = vmatpush1.msra.mxu0 0.0
        %870 = vmatprep.subr.mxu0 0.0
        %871 = vmatpush1.msra.mxu0 0.0
        %872 = vmatprep.subr.mxu0 0.0
        %873 = vmatpush1.msra.mxu0 0.0
        %874 = vmatprep.subr.mxu0 0.0
        %875 = vmatpush1.msra.mxu0 0.0
        %876 = vmatprep.subr.mxu0 0.0
        %877 = vmatpush1.msra.mxu0 %v621
        %878 = vmatprep.subr.mxu0 0.0
        %879 = vmatpush1.msra.mxu0 %v618
        %880 = vmatprep.subr.mxu0 0.0
        %881 = vmatpush1.msra.mxu0 %v615
        %882 = vmatprep.subr.mxu0 0.0
        %883 = vmatpush1.msra.mxu0 %v612
        %884 = vmatprep.subr.mxu0 0.0
        %885 = vmatpush2.msra.mxu0 0.0
        %886 = vmatprep.subr.mxu0 0.0
        %887 = vmatpush2.msra.mxu0 0.0
        %888 = vmatprep.subr.mxu0 0.0
        %889 = vmatpush2.msra.mxu0 0.0
        %890 = vmatprep.subr.mxu0 0.0
        %891 = vmatpush2.msra.mxu0 0.0
        %892 = vmatprep.subr.mxu0 0.0
        %893 = vmatpush2.msra.mxu0 0.0
        %894 = vmatprep.subr.mxu0 0.0
        %895 = vmatpush2.msra.mxu0 0.0
        %896 = vmatprep.subr.mxu0 0.0
        %897 = vmatpush2.msra.mxu0 0.0
        %898 = vmatprep.subr.mxu0 0.0
        %899 = vmatpush2.msra.mxu0 0.0
        %900 = vmatprep.subr.mxu0 0.0
        %901 = vmatpush2.msra.mxu0 0.0
        %902 = vmatprep.subr.mxu0 0.0
        %903 = vmatpush2.msra.mxu0 0.0
        %904 = vmatprep.subr.mxu0 0.0
        %905 = vmatpush2.msra.mxu0 0.0
        %906 = vmatprep.subr.mxu0 0.0
        %907 = vmatpush2.msra.mxu0 0.0
        %908 = vmatprep.subr.mxu0 0.0
        %909 = vmatpush2.msra.mxu0 0.0
        %910 = vmatprep.subr.mxu0 0.0
        %911 = vmatpush2.msra.mxu0 0.0
        %912 = vmatprep.subr.mxu0 0.0
        %913 = vmatpush2.msra.mxu0 0.0
        %914 = vmatprep.subr.mxu0 0.0
        %915 = vmatpush2.msra.mxu0 0.0
        %916 = vmatprep.mubr.f32.mxu0 0.0
        %917 = vmatmul.mubr.f32.gmra.mxu0 %v779
        %v918 = vpop.f32.mrf.mxu0
        %v919 = vadd.f32 %v775, %v918
        %v920 = vpop.f32.mrf.mxu0
        %921 = vdwg.mxu0
        %v922 = vld [vmem:[%s7] ss:$4 sm:$0x7]
        %v924 = vlaneseq
        %v925 = vshrl.u32 %v924, 7
        %v926 = vsub.s32 0, %v925
        %v927 = vrot.slane %v922, %v926
        %v928 = vlaneseq
        %v929 = vshrl.u32 %v928, 7
        %v930 = vsub.s32 1, %v929
        %v931 = vrot.slane %v922, %v930
        %v932 = vlaneseq
        %v933 = vshrl.u32 %v932, 7
        %v934 = vsub.s32 2, %v933
        %v935 = vrot.slane %v922, %v934
        %v939 = vadd.f32 %v848, %v927
        %v940 = vadd.f32 %v850, %v931
        %v941 = vadd.f32 %v919, %v935
        %v942 = vld [vmem:[#allocation6 + $0xc0] sm:$0xff]
        %v943 = vld [vmem:[#allocation6 + $0xc8] sm:$0xff]
        %v944 = vld [vmem:[#allocation6 + $0xd0] sm:$0xff]
        %v945 = vld [vmem:[#allocation6 + $0xd8] sm:$0xff]
        %v946 = vld [vmem:[#allocation6 + $0xe0] sm:$0xff]
        %v947 = vld [vmem:[#allocation6 + $0xe8] sm:$0xff]
        %v948 = vld [vmem:[#allocation6 + $0xf0] sm:$0xff]
        %v949 = vld [vmem:[#allocation6 + $0xf8] sm:$0xff]
        %v950 = vld [vmem:[#allocation6 + $0x100] sm:$0xff]
        %v951 = vld [vmem:[#allocation6 + $0x108] sm:$0xff]
        %v952 = vld [vmem:[#allocation6 + $0x110] sm:$0xff]
        %v953 = vld [vmem:[#allocation6 + $0x118] sm:$0xff]
        %s954 = scalar_lea.vmem %s7, 1
        %v955 = vld [vmem:[%s954] ss:$4 sm:$0x7]
        %v957 = vlaneseq
        %v958 = vshrl.u32 %v957, 7
        %v959 = vsub.s32 0, %v958
        %v960 = vrot.slane %v955, %v959
        %v961 = vlaneseq
        %v962 = vshrl.u32 %v961, 7
        %v963 = vsub.s32 1, %v962
        %v964 = vrot.slane %v955, %v963
        %v965 = vlaneseq
        %v966 = vshrl.u32 %v965, 7
        %v967 = vsub.s32 2, %v966
        %v968 = vrot.slane %v955, %v967
        %v973 = vsel %vm365, %v359, 0
        %975 = vmatprep.subr.mxu0 0.0
        %976 = vmatpush1.msra.mxu0 0.0
        %977 = vmatprep.subr.mxu0 0.0
        %978 = vmatpush1.msra.mxu0 0.0
        %979 = vmatprep.subr.mxu0 0.0
        %980 = vmatpush1.msra.mxu0 0.0
        %981 = vmatprep.subr.mxu0 0.0
        %982 = vmatpush1.msra.mxu0 0.0
        %983 = vmatprep.subr.mxu0 0.0
        %984 = vmatpush1.msra.mxu0 0.0
        %985 = vmatprep.subr.mxu0 0.0
        %986 = vmatpush1.msra.mxu0 0.0
        %987 = vmatprep.subr.mxu0 0.0
        %988 = vmatpush1.msra.mxu0 0.0
        %989 = vmatprep.subr.mxu0 0.0
        %990 = vmatpush1.msra.mxu0 0.0
        %991 = vmatprep.subr.mxu0 0.0
        %992 = vmatpush1.msra.mxu0 0.0
        %993 = vmatprep.subr.mxu0 0.0
        %994 = vmatpush1.msra.mxu0 0.0
        %995 = vmatprep.subr.mxu0 0.0
        %996 = vmatpush1.msra.mxu0 0.0
        %997 = vmatprep.subr.mxu0 0.0
        %998 = vmatpush1.msra.mxu0 0.0
        %999 = vmatprep.subr.mxu0 %v952
        %1000 = vmatpush1.msra.mxu0 %v951
        %1001 = vmatprep.subr.mxu0 %v949
        %1002 = vmatpush1.msra.mxu0 %v948
        %1003 = vmatprep.subr.mxu0 %v946
        %1004 = vmatpush1.msra.mxu0 %v945
        %1005 = vmatprep.subr.mxu0 %v943
        %1006 = vmatpush1.msra.mxu0 %v942
        %1007 = vmatprep.subr.mxu0 0.0
        %1008 = vmatpush2.msra.mxu0 0.0
        %1009 = vmatprep.subr.mxu0 0.0
        %1010 = vmatpush2.msra.mxu0 0.0
        %1011 = vmatprep.subr.mxu0 0.0
        %1012 = vmatpush2.msra.mxu0 0.0
        %1013 = vmatprep.subr.mxu0 0.0
        %1014 = vmatpush2.msra.mxu0 0.0
        %1015 = vmatprep.subr.mxu0 0.0
        %1016 = vmatpush2.msra.mxu0 0.0
        %1017 = vmatprep.subr.mxu0 0.0
        %1018 = vmatpush2.msra.mxu0 0.0
        %1019 = vmatprep.subr.mxu0 0.0
        %1020 = vmatpush2.msra.mxu0 0.0
        %1021 = vmatprep.subr.mxu0 0.0
        %1022 = vmatpush2.msra.mxu0 0.0
        %1023 = vmatprep.subr.mxu0 0.0
        %1024 = vmatpush2.msra.mxu0 0.0
        %1025 = vmatprep.subr.mxu0 0.0
        %1026 = vmatpush2.msra.mxu0 0.0
        %1027 = vmatprep.subr.mxu0 0.0
        %1028 = vmatpush2.msra.mxu0 0.0
        %1029 = vmatprep.subr.mxu0 0.0
        %1030 = vmatpush2.msra.mxu0 0.0
        %1031 = vmatprep.subr.mxu0 0.0
        %1032 = vmatpush2.msra.mxu0 0.0
        %1033 = vmatprep.subr.mxu0 0.0
        %1034 = vmatpush2.msra.mxu0 0.0
        %1035 = vmatprep.subr.mxu0 0.0
        %1036 = vmatpush2.msra.mxu0 0.0
        %1037 = vmatprep.subr.mxu0 0.0
        %1038 = vmatpush2.msra.mxu0 0.0
        %1039 = vmatprep.mubr.f32.mxu0 0.0
        %1040 = vmatmul.mubr.f32.gmra.mxu0 %v973
        %v1041 = vpop.f32.mrf.mxu0
        %v1042 = vadd.f32 %v960, %v1041
        %v1043 = vpop.f32.mrf.mxu0
        %v1044 = vadd.f32 %v964, %v1043
        %1045 = vdwg.mxu0
        %1046 = vmatprep.subr.mxu0 0.0
        %1047 = vmatpush1.msra.mxu0 0.0
        %1048 = vmatprep.subr.mxu0 0.0
        %1049 = vmatpush1.msra.mxu0 0.0
        %1050 = vmatprep.subr.mxu0 0.0
        %1051 = vmatpush1.msra.mxu0 0.0
        %1052 = vmatprep.subr.mxu0 0.0
        %1053 = vmatpush1.msra.mxu0 0.0
        %1054 = vmatprep.subr.mxu0 0.0
        %1055 = vmatpush1.msra.mxu0 0.0
        %1056 = vmatprep.subr.mxu0 0.0
        %1057 = vmatpush1.msra.mxu0 0.0
        %1058 = vmatprep.subr.mxu0 0.0
        %1059 = vmatpush1.msra.mxu0 0.0
        %1060 = vmatprep.subr.mxu0 0.0
        %1061 = vmatpush1.msra.mxu0 0.0
        %1062 = vmatprep.subr.mxu0 0.0
        %1063 = vmatpush1.msra.mxu0 0.0
        %1064 = vmatprep.subr.mxu0 0.0
        %1065 = vmatpush1.msra.mxu0 0.0
        %1066 = vmatprep.subr.mxu0 0.0
        %1067 = vmatpush1.msra.mxu0 0.0
        %1068 = vmatprep.subr.mxu0 0.0
        %1069 = vmatpush1.msra.mxu0 0.0
        %1070 = vmatprep.subr.mxu0 0.0
        %1071 = vmatpush1.msra.mxu0 %v953
        %1072 = vmatprep.subr.mxu0 0.0
        %1073 = vmatpush1.msra.mxu0 %v950
        %1074 = vmatprep.subr.mxu0 0.0
        %1075 = vmatpush1.msra.mxu0 %v947
        %1076 = vmatprep.subr.mxu0 0.0
        %1077 = vmatpush1.msra.mxu0 %v944
        %1078 = vmatprep.subr.mxu0 0.0
        %1079 = vmatpush2.msra.mxu0 0.0
        %1080 = vmatprep.subr.mxu0 0.0
        %1081 = vmatpush2.msra.mxu0 0.0
        %1082 = vmatprep.subr.mxu0 0.0
        %1083 = vmatpush2.msra.mxu0 0.0
        %1084 = vmatprep.subr.mxu0 0.0
        %1085 = vmatpush2.msra.mxu0 0.0
        %1086 = vmatprep.subr.mxu0 0.0
        %1087 = vmatpush2.msra.mxu0 0.0
        %1088 = vmatprep.subr.mxu0 0.0
        %1089 = vmatpush2.msra.mxu0 0.0
        %1090 = vmatprep.subr.mxu0 0.0
        %1091 = vmatpush2.msra.mxu0 0.0
        %1092 = vmatprep.subr.mxu0 0.0
        %1093 = vmatpush2.msra.mxu0 0.0
        %1094 = vmatprep.subr.mxu0 0.0
        %1095 = vmatpush2.msra.mxu0 0.0
        %1096 = vmatprep.subr.mxu0 0.0
        %1097 = vmatpush2.msra.mxu0 0.0
        %1098 = vmatprep.subr.mxu0 0.0
        %1099 = vmatpush2.msra.mxu0 0.0
        %1100 = vmatprep.subr.mxu0 0.0
        %1101 = vmatpush2.msra.mxu0 0.0
        %1102 = vmatprep.subr.mxu0 0.0
        %1103 = vmatpush2.msra.mxu0 0.0
        %1104 = vmatprep.subr.mxu0 0.0
        %1105 = vmatpush2.msra.mxu0 0.0
        %1106 = vmatprep.subr.mxu0 0.0
        %1107 = vmatpush2.msra.mxu0 0.0
        %1108 = vmatprep.subr.mxu0 0.0
        %1109 = vmatpush2.msra.mxu0 0.0
        %1110 = vmatprep.mubr.f32.mxu0 0.0
        %1111 = vmatmul.mubr.f32.gmra.mxu0 %v973
        %v1112 = vpop.f32.mrf.mxu0
        %v1113 = vadd.f32 %v968, %v1112
        %v1114 = vpop.f32.mrf.mxu0
        %1115 = vdwg.mxu0
        %v1116 = vadd.f32 %v939, %v1042
        %v1117 = vxor.u32 %v1116, 2147483648
        %v1118 = vmul.f32 %v1117, 1.442695
        %v1119 = vpow.pop %v1118
        %v1120 = vadd.f32 %v1119, 1.0
        %v1121 = vrcp.pop %v1120
        %v1122 = vmul.f32 1.0, %v1121
        %v1123 = vadd.f32 %v940, %v1044
        %v1124 = vxor.u32 %v1123, 2147483648
        %v1125 = vmul.f32 %v1124, 1.442695
        %v1126 = vpow.pop %v1125
        %v1127 = vadd.f32 %v1126, 1.0
        %v1128 = vrcp.pop %v1127
        %v1129 = vmul.f32 1.0, %v1128
        %v1130 = vmul.f32 %v1122, %v1113
        %v1131 = vadd.f32 %v941, %v1130
        %v1132 = vtanh.pop %v1131
        %v1133 = vsub.f32 1.0, %v1129
        %v1134 = vmul.f32 %v1133, %v1132
        %v1135 = vmul.f32 %v1129, %v359
        %v1136 = vadd.f32 %v1134, %v1135
        %v1137 = vld [vmem:[#allocation6 + $0x120] sm:$0xff]
        %v1138 = vld [vmem:[#allocation6 + $0x128] sm:$0xff]
        %v1139 = vld [vmem:[#allocation6 + $0x130] sm:$0xff]
        %v1140 = vld [vmem:[#allocation6 + $0x138] sm:$0xff]
        %v1141 = vld [vmem:[#allocation6 + $0x140] sm:$0xff]
        %v1142 = vld [vmem:[#allocation6 + $0x148] sm:$0xff]
        %v1143 = vld [vmem:[#allocation6 + $0x150] sm:$0xff]
        %v1144 = vld [vmem:[#allocation6 + $0x158] sm:$0xff]
        %v1145 = vld [vmem:[#allocation6 + $0x160] sm:$0xff]
        %v1146 = vld [vmem:[#allocation6 + $0x168] sm:$0xff]
        %v1147 = vld [vmem:[#allocation6 + $0x170] sm:$0xff]
        %v1148 = vld [vmem:[#allocation6 + $0x178] sm:$0xff]
        %s1149 = scalar_lea.vmem %s7, 2
        %v1150 = vld [vmem:[%s1149] ss:$4 sm:$0x7]
        %v1152 = vlaneseq
        %v1153 = vshrl.u32 %v1152, 7
        %v1154 = vsub.s32 0, %v1153
        %v1155 = vrot.slane %v1150, %v1154
        %v1156 = vlaneseq
        %v1157 = vshrl.u32 %v1156, 7
        %v1158 = vsub.s32 1, %v1157
        %v1159 = vrot.slane %v1150, %v1158
        %v1160 = vlaneseq
        %v1161 = vshrl.u32 %v1160, 7
        %v1162 = vsub.s32 2, %v1161
        %v1163 = vrot.slane %v1150, %v1162
        %v1168 = vsel %vm365, %v1136, 0
        %1170 = vmatprep.subr.mxu0 0.0
        %1171 = vmatpush1.msra.mxu0 0.0
        %1172 = vmatprep.subr.mxu0 0.0
        %1173 = vmatpush1.msra.mxu0 0.0
        %1174 = vmatprep.subr.mxu0 0.0
        %1175 = vmatpush1.msra.mxu0 0.0
        %1176 = vmatprep.subr.mxu0 0.0
        %1177 = vmatpush1.msra.mxu0 0.0
        %1178 = vmatprep.subr.mxu0 0.0
        %1179 = vmatpush1.msra.mxu0 0.0
        %1180 = vmatprep.subr.mxu0 0.0
        %1181 = vmatpush1.msra.mxu0 0.0
        %1182 = vmatprep.subr.mxu0 0.0
        %1183 = vmatpush1.msra.mxu0 0.0
        %1184 = vmatprep.subr.mxu0 0.0
        %1185 = vmatpush1.msra.mxu0 0.0
        %1186 = vmatprep.subr.mxu0 0.0
        %1187 = vmatpush1.msra.mxu0 0.0
        %1188 = vmatprep.subr.mxu0 0.0
        %1189 = vmatpush1.msra.mxu0 0.0
        %1190 = vmatprep.subr.mxu0 0.0
        %1191 = vmatpush1.msra.mxu0 0.0
        %1192 = vmatprep.subr.mxu0 0.0
        %1193 = vmatpush1.msra.mxu0 0.0
        %1194 = vmatprep.subr.mxu0 %v1147
        %1195 = vmatpush1.msra.mxu0 %v1146
        %1196 = vmatprep.subr.mxu0 %v1144
        %1197 = vmatpush1.msra.mxu0 %v1143
        %1198 = vmatprep.subr.mxu0 %v1141
        %1199 = vmatpush1.msra.mxu0 %v1140
        %1200 = vmatprep.subr.mxu0 %v1138
        %1201 = vmatpush1.msra.mxu0 %v1137
        %1202 = vmatprep.subr.mxu0 0.0
        %1203 = vmatpush2.msra.mxu0 0.0
        %1204 = vmatprep.subr.mxu0 0.0
        %1205 = vmatpush2.msra.mxu0 0.0
        %1206 = vmatprep.subr.mxu0 0.0
        %1207 = vmatpush2.msra.mxu0 0.0
        %1208 = vmatprep.subr.mxu0 0.0
        %1209 = vmatpush2.msra.mxu0 0.0
        %1210 = vmatprep.subr.mxu0 0.0
        %1211 = vmatpush2.msra.mxu0 0.0
        %1212 = vmatprep.subr.mxu0 0.0
        %1213 = vmatpush2.msra.mxu0 0.0
        %1214 = vmatprep.subr.mxu0 0.0
        %1215 = vmatpush2.msra.mxu0 0.0
        %1216 = vmatprep.subr.mxu0 0.0
        %1217 = vmatpush2.msra.mxu0 0.0
        %1218 = vmatprep.subr.mxu0 0.0
        %1219 = vmatpush2.msra.mxu0 0.0
        %1220 = vmatprep.subr.mxu0 0.0
        %1221 = vmatpush2.msra.mxu0 0.0
        %1222 = vmatprep.subr.mxu0 0.0
        %1223 = vmatpush2.msra.mxu0 0.0
        %1224 = vmatprep.subr.mxu0 0.0
        %1225 = vmatpush2.msra.mxu0 0.0
        %1226 = vmatprep.subr.mxu0 0.0
        %1227 = vmatpush2.msra.mxu0 0.0
        %1228 = vmatprep.subr.mxu0 0.0
        %1229 = vmatpush2.msra.mxu0 0.0
        %1230 = vmatprep.subr.mxu0 0.0
        %1231 = vmatpush2.msra.mxu0 0.0
        %1232 = vmatprep.subr.mxu0 0.0
        %1233 = vmatpush2.msra.mxu0 0.0
        %1234 = vmatprep.mubr.f32.mxu0 0.0
        %1235 = vmatmul.mubr.f32.gmra.mxu0 %v1168
        %v1236 = vpop.f32.mrf.mxu0
        %v1237 = vadd.f32 %v1155, %v1236
        %v1238 = vpop.f32.mrf.mxu0
        %v1239 = vadd.f32 %v1159, %v1238
        %1240 = vdwg.mxu0
        %1241 = vmatprep.subr.mxu0 0.0
        %1242 = vmatpush1.msra.mxu0 0.0
        %1243 = vmatprep.subr.mxu0 0.0
        %1244 = vmatpush1.msra.mxu0 0.0
        %1245 = vmatprep.subr.mxu0 0.0
        %1246 = vmatpush1.msra.mxu0 0.0
        %1247 = vmatprep.subr.mxu0 0.0
        %1248 = vmatpush1.msra.mxu0 0.0
        %1249 = vmatprep.subr.mxu0 0.0
        %1250 = vmatpush1.msra.mxu0 0.0
        %1251 = vmatprep.subr.mxu0 0.0
        %1252 = vmatpush1.msra.mxu0 0.0
        %1253 = vmatprep.subr.mxu0 0.0
        %1254 = vmatpush1.msra.mxu0 0.0
        %1255 = vmatprep.subr.mxu0 0.0
        %1256 = vmatpush1.msra.mxu0 0.0
        %1257 = vmatprep.subr.mxu0 0.0
        %1258 = vmatpush1.msra.mxu0 0.0
        %1259 = vmatprep.subr.mxu0 0.0
        %1260 = vmatpush1.msra.mxu0 0.0
        %1261 = vmatprep.subr.mxu0 0.0
        %1262 = vmatpush1.msra.mxu0 0.0
        %1263 = vmatprep.subr.mxu0 0.0
        %1264 = vmatpush1.msra.mxu0 0.0
        %1265 = vmatprep.subr.mxu0 0.0
        %1266 = vmatpush1.msra.mxu0 %v1148
        %1267 = vmatprep.subr.mxu0 0.0
        %1268 = vmatpush1.msra.mxu0 %v1145
        %1269 = vmatprep.subr.mxu0 0.0
        %1270 = vmatpush1.msra.mxu0 %v1142
        %1271 = vmatprep.subr.mxu0 0.0
        %1272 = vmatpush1.msra.mxu0 %v1139
        %1273 = vmatprep.subr.mxu0 0.0
        %1274 = vmatpush2.msra.mxu0 0.0
        %1275 = vmatprep.subr.mxu0 0.0
        %1276 = vmatpush2.msra.mxu0 0.0
        %1277 = vmatprep.subr.mxu0 0.0
        %1278 = vmatpush2.msra.mxu0 0.0
        %1279 = vmatprep.subr.mxu0 0.0
        %1280 = vmatpush2.msra.mxu0 0.0
        %1281 = vmatprep.subr.mxu0 0.0
        %1282 = vmatpush2.msra.mxu0 0.0
        %1283 = vmatprep.subr.mxu0 0.0
        %1284 = vmatpush2.msra.mxu0 0.0
        %1285 = vmatprep.subr.mxu0 0.0
        %1286 = vmatpush2.msra.mxu0 0.0
        %1287 = vmatprep.subr.mxu0 0.0
        %1288 = vmatpush2.msra.mxu0 0.0
        %1289 = vmatprep.subr.mxu0 0.0
        %1290 = vmatpush2.msra.mxu0 0.0
        %1291 = vmatprep.subr.mxu0 0.0
        %1292 = vmatpush2.msra.mxu0 0.0
        %1293 = vmatprep.subr.mxu0 0.0
        %1294 = vmatpush2.msra.mxu0 0.0
        %1295 = vmatprep.subr.mxu0 0.0
        %1296 = vmatpush2.msra.mxu0 0.0
        %1297 = vmatprep.subr.mxu0 0.0
        %1298 = vmatpush2.msra.mxu0 0.0
        %1299 = vmatprep.subr.mxu0 0.0
        %1300 = vmatpush2.msra.mxu0 0.0
        %1301 = vmatprep.subr.mxu0 0.0
        %1302 = vmatpush2.msra.mxu0 0.0
        %1303 = vmatprep.subr.mxu0 0.0
        %1304 = vmatpush2.msra.mxu0 0.0
        %1305 = vmatprep.mubr.f32.mxu0 0.0
        %1306 = vmatmul.mubr.f32.gmra.mxu0 %v1168
        %v1307 = vpop.f32.mrf.mxu0
        %v1308 = vadd.f32 %v1163, %v1307
        %v1309 = vpop.f32.mrf.mxu0
        %1310 = vdwg.mxu0
        %v1311 = vld [vmem:[#allocation6 + $0x180] sm:$0xff]
        %v1312 = vld [vmem:[#allocation6 + $0x188] sm:$0xff]
        %v1313 = vld [vmem:[#allocation6 + $0x190] sm:$0xff]
        %v1314 = vld [vmem:[#allocation6 + $0x198] sm:$0xff]
        %v1315 = vld [vmem:[#allocation6 + $0x1a0] sm:$0xff]
        %v1316 = vld [vmem:[#allocation6 + $0x1a8] sm:$0xff]
        %v1317 = vld [vmem:[#allocation6 + $0x1b0] sm:$0xff]
        %v1318 = vld [vmem:[#allocation6 + $0x1b8] sm:$0xff]
        %v1319 = vld [vmem:[#allocation6 + $0x1c0] sm:$0xff]
        %v1320 = vld [vmem:[#allocation6 + $0x1c8] sm:$0xff]
        %v1321 = vld [vmem:[#allocation6 + $0x1d0] sm:$0xff]
        %v1322 = vld [vmem:[#allocation6 + $0x1d8] sm:$0xff]
        %s1323 = scalar_lea.vmem %s7, 3
        %v1324 = vld [vmem:[%s1323] ss:$4 sm:$0x7]
        %v1326 = vlaneseq
        %v1327 = vshrl.u32 %v1326, 7
        %v1328 = vsub.s32 0, %v1327
        %v1329 = vrot.slane %v1324, %v1328
        %v1330 = vlaneseq
        %v1331 = vshrl.u32 %v1330, 7
        %v1332 = vsub.s32 1, %v1331
        %v1333 = vrot.slane %v1324, %v1332
        %v1334 = vlaneseq
        %v1335 = vshrl.u32 %v1334, 7
        %v1336 = vsub.s32 2, %v1335
        %v1337 = vrot.slane %v1324, %v1336
        %1341 = vmatprep.subr.mxu0 0.0
        %1342 = vmatpush1.msra.mxu0 0.0
        %1343 = vmatprep.subr.mxu0 0.0
        %1344 = vmatpush1.msra.mxu0 0.0
        %1345 = vmatprep.subr.mxu0 0.0
        %1346 = vmatpush1.msra.mxu0 0.0
        %1347 = vmatprep.subr.mxu0 0.0
        %1348 = vmatpush1.msra.mxu0 0.0
        %1349 = vmatprep.subr.mxu0 0.0
        %1350 = vmatpush1.msra.mxu0 0.0
        %1351 = vmatprep.subr.mxu0 0.0
        %1352 = vmatpush1.msra.mxu0 0.0
        %1353 = vmatprep.subr.mxu0 0.0
        %1354 = vmatpush1.msra.mxu0 0.0
        %1355 = vmatprep.subr.mxu0 0.0
        %1356 = vmatpush1.msra.mxu0 0.0
        %1357 = vmatprep.subr.mxu0 0.0
        %1358 = vmatpush1.msra.mxu0 0.0
        %1359 = vmatprep.subr.mxu0 0.0
        %1360 = vmatpush1.msra.mxu0 0.0
        %1361 = vmatprep.subr.mxu0 0.0
        %1362 = vmatpush1.msra.mxu0 0.0
        %1363 = vmatprep.subr.mxu0 0.0
        %1364 = vmatpush1.msra.mxu0 0.0
        %1365 = vmatprep.subr.mxu0 %v1321
        %1366 = vmatpush1.msra.mxu0 %v1320
        %1367 = vmatprep.subr.mxu0 %v1318
        %1368 = vmatpush1.msra.mxu0 %v1317
        %1369 = vmatprep.subr.mxu0 %v1315
        %1370 = vmatpush1.msra.mxu0 %v1314
        %1371 = vmatprep.subr.mxu0 %v1312
        %1372 = vmatpush1.msra.mxu0 %v1311
        %1373 = vmatprep.subr.mxu0 0.0
        %1374 = vmatpush2.msra.mxu0 0.0
        %1375 = vmatprep.subr.mxu0 0.0
        %1376 = vmatpush2.msra.mxu0 0.0
        %1377 = vmatprep.subr.mxu0 0.0
        %1378 = vmatpush2.msra.mxu0 0.0
        %1379 = vmatprep.subr.mxu0 0.0
        %1380 = vmatpush2.msra.mxu0 0.0
        %1381 = vmatprep.subr.mxu0 0.0
        %1382 = vmatpush2.msra.mxu0 0.0
        %1383 = vmatprep.subr.mxu0 0.0
        %1384 = vmatpush2.msra.mxu0 0.0
        %1385 = vmatprep.subr.mxu0 0.0
        %1386 = vmatpush2.msra.mxu0 0.0
        %1387 = vmatprep.subr.mxu0 0.0
        %1388 = vmatpush2.msra.mxu0 0.0
        %1389 = vmatprep.subr.mxu0 0.0
        %1390 = vmatpush2.msra.mxu0 0.0
        %1391 = vmatprep.subr.mxu0 0.0
        %1392 = vmatpush2.msra.mxu0 0.0
        %1393 = vmatprep.subr.mxu0 0.0
        %1394 = vmatpush2.msra.mxu0 0.0
        %1395 = vmatprep.subr.mxu0 0.0
        %1396 = vmatpush2.msra.mxu0 0.0
        %1397 = vmatprep.subr.mxu0 0.0
        %1398 = vmatpush2.msra.mxu0 0.0
        %1399 = vmatprep.subr.mxu0 0.0
        %1400 = vmatpush2.msra.mxu0 0.0
        %1401 = vmatprep.subr.mxu0 0.0
        %1402 = vmatpush2.msra.mxu0 0.0
        %1403 = vmatprep.subr.mxu0 0.0
        %1404 = vmatpush2.msra.mxu0 0.0
        %1405 = vmatprep.mubr.f32.mxu0 0.0
        %1406 = vmatmul.mubr.f32.gmra.mxu0 %v367
        %v1407 = vpop.f32.mrf.mxu0
        %v1408 = vadd.f32 %v1329, %v1407
        %v1409 = vpop.f32.mrf.mxu0
        %v1410 = vadd.f32 %v1333, %v1409
        %1411 = vdwg.mxu0
        %1412 = vmatprep.subr.mxu0 0.0
        %1413 = vmatpush1.msra.mxu0 0.0
        %1414 = vmatprep.subr.mxu0 0.0
        %1415 = vmatpush1.msra.mxu0 0.0
        %1416 = vmatprep.subr.mxu0 0.0
        %1417 = vmatpush1.msra.mxu0 0.0
        %1418 = vmatprep.subr.mxu0 0.0
        %1419 = vmatpush1.msra.mxu0 0.0
        %1420 = vmatprep.subr.mxu0 0.0
        %1421 = vmatpush1.msra.mxu0 0.0
        %1422 = vmatprep.subr.mxu0 0.0
        %1423 = vmatpush1.msra.mxu0 0.0
        %1424 = vmatprep.subr.mxu0 0.0
        %1425 = vmatpush1.msra.mxu0 0.0
        %1426 = vmatprep.subr.mxu0 0.0
        %1427 = vmatpush1.msra.mxu0 0.0
        %1428 = vmatprep.subr.mxu0 0.0
        %1429 = vmatpush1.msra.mxu0 0.0
        %1430 = vmatprep.subr.mxu0 0.0
        %1431 = vmatpush1.msra.mxu0 0.0
        %1432 = vmatprep.subr.mxu0 0.0
        %1433 = vmatpush1.msra.mxu0 0.0
        %1434 = vmatprep.subr.mxu0 0.0
        %1435 = vmatpush1.msra.mxu0 0.0
        %1436 = vmatprep.subr.mxu0 0.0
        %1437 = vmatpush1.msra.mxu0 %v1322
        %1438 = vmatprep.subr.mxu0 0.0
        %1439 = vmatpush1.msra.mxu0 %v1319
        %1440 = vmatprep.subr.mxu0 0.0
        %1441 = vmatpush1.msra.mxu0 %v1316
        %1442 = vmatprep.subr.mxu0 0.0
        %1443 = vmatpush1.msra.mxu0 %v1313
        %1444 = vmatprep.subr.mxu0 0.0
        %1445 = vmatpush2.msra.mxu0 0.0
        %1446 = vmatprep.subr.mxu0 0.0
        %1447 = vmatpush2.msra.mxu0 0.0
        %1448 = vmatprep.subr.mxu0 0.0
        %1449 = vmatpush2.msra.mxu0 0.0
        %1450 = vmatprep.subr.mxu0 0.0
        %1451 = vmatpush2.msra.mxu0 0.0
        %1452 = vmatprep.subr.mxu0 0.0
        %1453 = vmatpush2.msra.mxu0 0.0
        %1454 = vmatprep.subr.mxu0 0.0
        %1455 = vmatpush2.msra.mxu0 0.0
        %1456 = vmatprep.subr.mxu0 0.0
        %1457 = vmatpush2.msra.mxu0 0.0
        %1458 = vmatprep.subr.mxu0 0.0
        %1459 = vmatpush2.msra.mxu0 0.0
        %1460 = vmatprep.subr.mxu0 0.0
        %1461 = vmatpush2.msra.mxu0 0.0
        %1462 = vmatprep.subr.mxu0 0.0
        %1463 = vmatpush2.msra.mxu0 0.0
        %1464 = vmatprep.subr.mxu0 0.0
        %1465 = vmatpush2.msra.mxu0 0.0
        %1466 = vmatprep.subr.mxu0 0.0
        %1467 = vmatpush2.msra.mxu0 0.0
        %1468 = vmatprep.subr.mxu0 0.0
        %1469 = vmatpush2.msra.mxu0 0.0
        %1470 = vmatprep.subr.mxu0 0.0
        %1471 = vmatpush2.msra.mxu0 0.0
        %1472 = vmatprep.subr.mxu0 0.0
        %1473 = vmatpush2.msra.mxu0 0.0
        %1474 = vmatprep.subr.mxu0 0.0
        %1475 = vmatpush2.msra.mxu0 0.0
        %1476 = vmatprep.mubr.f32.mxu0 0.0
        %1477 = vmatmul.mubr.f32.gmra.mxu0 %v367
        %v1478 = vpop.f32.mrf.mxu0
        %v1479 = vadd.f32 %v1337, %v1478
        %v1480 = vpop.f32.mrf.mxu0
        %1481 = vdwg.mxu0
        %v1482 = vadd.f32 %v1237, %v1408
        %v1483 = vxor.u32 %v1482, 2147483648
        %v1484 = vmul.f32 %v1483, 1.442695
        %v1485 = vpow.pop %v1484
        %v1486 = vadd.f32 %v1485, 1.0
        %v1487 = vrcp.pop %v1486
        %v1488 = vmul.f32 1.0, %v1487
        %v1489 = vadd.f32 %v1239, %v1410
        %v1490 = vxor.u32 %v1489, 2147483648
        %v1491 = vmul.f32 %v1490, 1.442695
        %v1492 = vpow.pop %v1491
        %v1493 = vadd.f32 %v1492, 1.0
        %v1494 = vrcp.pop %v1493
        %v1495 = vmul.f32 1.0, %v1494
        %v1496 = vmul.f32 %v1488, %v1479
        %v1497 = vadd.f32 %v1308, %v1496
        %v1498 = vtanh.pop %v1497
        %v1499 = vsub.f32 1.0, %v1495
        %v1500 = vmul.f32 %v1499, %v1498
        %v1501 = vmul.f32 %v1495, %v360
        %v1502 = vadd.f32 %v1500, %v1501
        %v1503 = vld [vmem:[%s8] sm:$0xff]
        %v1504 = vld [vmem:[%s8 + $0x8] sm:$0xff]
        %v1505 = vld [vmem:[%s8 + $0x10] sm:$0xff]
        %v1506 = vld [vmem:[%s8 + $0x18] sm:$0xff]
        %v1507 = vld [vmem:[%s8 + $0x20] sm:$0xff]
        %v1508 = vld [vmem:[%s8 + $0x28] sm:$0xff]
        %v1509 = vld [vmem:[%s8 + $0x30] sm:$0xff]
        %v1510 = vld [vmem:[%s8 + $0x38] sm:$0xff]
        %1511 = vmatprep.subr.mxu0 0.0
        %1512 = vmatpush1.msra.mxu0 0.0
        %1513 = vmatprep.subr.mxu0 0.0
        %1514 = vmatpush1.msra.mxu0 0.0
        %1515 = vmatprep.subr.mxu0 0.0
        %1516 = vmatpush1.msra.mxu0 0.0
        %1517 = vmatprep.subr.mxu0 0.0
        %1518 = vmatpush1.msra.mxu0 0.0
        %1519 = vmatprep.subr.mxu0 0.0
        %1520 = vmatpush1.msra.mxu0 0.0
        %1521 = vmatprep.subr.mxu0 0.0
        %1522 = vmatpush1.msra.mxu0 0.0
        %1523 = vmatprep.subr.mxu0 0.0
        %1524 = vmatpush1.msra.mxu0 0.0
        %1525 = vmatprep.subr.mxu0 0.0
        %1526 = vmatpush1.msra.mxu0 0.0
        %1527 = vmatprep.subr.mxu0 0.0
        %1528 = vmatpush1.msra.mxu0 0.0
        %1529 = vmatprep.subr.mxu0 0.0
        %1530 = vmatpush1.msra.mxu0 0.0
        %1531 = vmatprep.subr.mxu0 0.0
        %1532 = vmatpush1.msra.mxu0 0.0
        %1533 = vmatprep.subr.mxu0 0.0
        %1534 = vmatpush1.msra.mxu0 0.0
        %1535 = vmatprep.subr.mxu0 0.0
        %1536 = vmatpush1.msra.mxu0 %v1510
        %1537 = vmatprep.subr.mxu0 0.0
        %1538 = vmatpush1.msra.mxu0 %v1509
        %1539 = vmatprep.subr.mxu0 0.0
        %1540 = vmatpush1.msra.mxu0 %v1508
        %1541 = vmatprep.subr.mxu0 0.0
        %1542 = vmatpush1.msra.mxu0 %v1507
        %1543 = vmatprep.subr.mxu0 0.0
        %1544 = vmatpush2.msra.mxu0 0.0
        %1545 = vmatprep.subr.mxu0 0.0
        %1546 = vmatpush2.msra.mxu0 0.0
        %1547 = vmatprep.subr.mxu0 0.0
        %1548 = vmatpush2.msra.mxu0 0.0
        %1549 = vmatprep.subr.mxu0 0.0
        %1550 = vmatpush2.msra.mxu0 0.0
        %1551 = vmatprep.subr.mxu0 0.0
        %1552 = vmatpush2.msra.mxu0 0.0
        %1553 = vmatprep.subr.mxu0 0.0
        %1554 = vmatpush2.msra.mxu0 0.0
        %1555 = vmatprep.subr.mxu0 0.0
        %1556 = vmatpush2.msra.mxu0 0.0
        %1557 = vmatprep.subr.mxu0 0.0
        %1558 = vmatpush2.msra.mxu0 0.0
        %1559 = vmatprep.subr.mxu0 0.0
        %1560 = vmatpush2.msra.mxu0 0.0
        %1561 = vmatprep.subr.mxu0 0.0
        %1562 = vmatpush2.msra.mxu0 0.0
        %1563 = vmatprep.subr.mxu0 0.0
        %1564 = vmatpush2.msra.mxu0 0.0
        %1565 = vmatprep.subr.mxu0 0.0
        %1566 = vmatpush2.msra.mxu0 0.0
        %1567 = vmatprep.subr.mxu0 0.0
        %1568 = vmatpush2.msra.mxu0 0.0
        %1569 = vmatprep.subr.mxu0 0.0
        %1570 = vmatpush2.msra.mxu0 0.0
        %1571 = vmatprep.subr.mxu0 0.0
        %1572 = vmatpush2.msra.mxu0 0.0
        %1573 = vmatprep.subr.mxu0 0.0
        %1574 = vmatpush2.msra.mxu0 0.0
        %1575 = vmatprep.mubr.f32.mxu0 0.0
        %1576 = vmatmul.mubr.f32.gmra.mxu0 %v635
        %v1577 = vpop.f32.mrf.mxu0
        %v1578 = vadd.f32 0.0, %v1577
        %v1579 = vpop.f32.mrf.mxu0
        %1580 = vdwg.mxu0
        %v1582 = vsel %vm365, %v1502, 0
        %1584 = vmatprep.subr.mxu0 0.0
        %1585 = vmatpush1.msra.mxu0 0.0
        %1586 = vmatprep.subr.mxu0 0.0
        %1587 = vmatpush1.msra.mxu0 0.0
        %1588 = vmatprep.subr.mxu0 0.0
        %1589 = vmatpush1.msra.mxu0 0.0
        %1590 = vmatprep.subr.mxu0 0.0
        %1591 = vmatpush1.msra.mxu0 0.0
        %1592 = vmatprep.subr.mxu0 0.0
        %1593 = vmatpush1.msra.mxu0 0.0
        %1594 = vmatprep.subr.mxu0 0.0
        %1595 = vmatpush1.msra.mxu0 0.0
        %1596 = vmatprep.subr.mxu0 0.0
        %1597 = vmatpush1.msra.mxu0 0.0
        %1598 = vmatprep.subr.mxu0 0.0
        %1599 = vmatpush1.msra.mxu0 0.0
        %1600 = vmatprep.subr.mxu0 0.0
        %1601 = vmatpush1.msra.mxu0 0.0
        %1602 = vmatprep.subr.mxu0 0.0
        %1603 = vmatpush1.msra.mxu0 0.0
        %1604 = vmatprep.subr.mxu0 0.0
        %1605 = vmatpush1.msra.mxu0 0.0
        %1606 = vmatprep.subr.mxu0 0.0
        %1607 = vmatpush1.msra.mxu0 0.0
        %1608 = vmatprep.subr.mxu0 0.0
        %1609 = vmatpush1.msra.mxu0 %v1506
        %1610 = vmatprep.subr.mxu0 0.0
        %1611 = vmatpush1.msra.mxu0 %v1505
        %1612 = vmatprep.subr.mxu0 0.0
        %1613 = vmatpush1.msra.mxu0 %v1504
        %1614 = vmatprep.subr.mxu0 0.0
        %1615 = vmatpush1.msra.mxu0 %v1503
        %1616 = vmatprep.subr.mxu0 0.0
        %1617 = vmatpush2.msra.mxu0 0.0
        %1618 = vmatprep.subr.mxu0 0.0
        %1619 = vmatpush2.msra.mxu0 0.0
        %1620 = vmatprep.subr.mxu0 0.0
        %1621 = vmatpush2.msra.mxu0 0.0
        %1622 = vmatprep.subr.mxu0 0.0
        %1623 = vmatpush2.msra.mxu0 0.0
        %1624 = vmatprep.subr.mxu0 0.0
        %1625 = vmatpush2.msra.mxu0 0.0
        %1626 = vmatprep.subr.mxu0 0.0
        %1627 = vmatpush2.msra.mxu0 0.0
        %1628 = vmatprep.subr.mxu0 0.0
        %1629 = vmatpush2.msra.mxu0 0.0
        %1630 = vmatprep.subr.mxu0 0.0
        %1631 = vmatpush2.msra.mxu0 0.0
        %1632 = vmatprep.subr.mxu0 0.0
        %1633 = vmatpush2.msra.mxu0 0.0
        %1634 = vmatprep.subr.mxu0 0.0
        %1635 = vmatpush2.msra.mxu0 0.0
        %1636 = vmatprep.subr.mxu0 0.0
        %1637 = vmatpush2.msra.mxu0 0.0
        %1638 = vmatprep.subr.mxu0 0.0
        %1639 = vmatpush2.msra.mxu0 0.0
        %1640 = vmatprep.subr.mxu0 0.0
        %1641 = vmatpush2.msra.mxu0 0.0
        %1642 = vmatprep.subr.mxu0 0.0
        %1643 = vmatpush2.msra.mxu0 0.0
        %1644 = vmatprep.subr.mxu0 0.0
        %1645 = vmatpush2.msra.mxu0 0.0
        %1646 = vmatprep.subr.mxu0 0.0
        %1647 = vmatpush2.msra.mxu0 0.0
        %1648 = vmatprep.mubr.f32.mxu0 0.0
        %1649 = vmatmul.mubr.f32.gmra.mxu0 %v1582
        %v1650 = vpop.f32.mrf.mxu0
        %v1651 = vadd.f32 %v1578, %v1650
        %v1652 = vpop.f32.mrf.mxu0
        %1653 = vdwg.mxu0
        %v1654 = vld [vmem:[%s8 + $0x40] sm:$0x1]
        %v1655 = vadd.f32 %v1651, %v1654
        %1656 = vst [vmem:[#allocation2] sm:$0x1] %v1136
        %1657 = vst [vmem:[#allocation3] sm:$0x1] %v1502
        %s1658 = scalar_lea.vmem [#allocation9], %s32
        %1659 = vst [vmem:[%s1658] sm:$0x1] %v1655
        %s1660 = scalar_lea.vmem [#allocation12], %s32
        %1661 = vst.msk [vmem:[%s1660] sm:$0x1] %vm523, %v534
        %p1662 = scmp.eq.s32.totalorder %s32, 7
        // Predicated region
        $region61: #{decoder_forward.1} parent=51 // pred_check
          %p1663 = pneg %p1662
        $region62: #{decoder_forward.1} parent=51 // pred_check_branch
          %1665 = sbr.rel (%p1663) target = $region64
        $region63: #{decoder_forward.1} parent=51 // pred_region
          %1666 = vst [vmem:[#allocation10] sm:$0x1] %v1136
          %1667 = vst [vmem:[#allocation10 + $0x1] sm:$0x1] %v1502
        $region64: #{decoder_forward.1} parent=51 // pred_fallthru
          _
        // Predicated region
        $region65: #{decoder_forward.1} parent=51 // pred_check
          %p1668 = pneg %p213
        $region66: #{decoder_forward.1} parent=51 // pred_check_branch
          %1670 = sbr.rel (%p1668) target = $region68
        $region67: #{decoder_forward.1} parent=51 // pred_region
          %s1672 = ssub.s32 128, 128
          %1673 = vsyncadd [#allocation8], %s1672
          %s1675 = sshll.u32 [#allocation9], 4
          %s1676 = int_to_ptr.vmem [resolvable:$true] %s1675
          %1678 = dma.vmem_to_hbm [thread:$0]  %s1676, 128, %s9, [#allocation8]
        $region68: #{decoder_forward.1} parent=51 // pred_fallthru
          _
        // Predicated region
        $region69: #{decoder_forward.1} parent=51 // pred_check
          %p1679 = pneg %p234
        $region70: #{decoder_forward.1} parent=51 // pred_check_branch
          %1681 = sbr.rel (%p1679) target = $region72
        $region71: #{decoder_forward.1} parent=51 // pred_region
          %s1683 = ssub.s32 32, 32
          %1684 = vsyncadd [#allocation11], %s1683
          %s1686 = sshll.u32 [#allocation10], 4
          %s1687 = int_to_ptr.vmem [resolvable:$true] %s1686
          %1689 = dma.vmem_to_hbm [thread:$0]  %s1687, 32, %s10, [#allocation11]
        $region72: #{decoder_forward.1} parent=51 // pred_fallthru
          _
        // Predicated region
        $region73: #{decoder_forward.1} parent=51 // pred_check
          %p1690 = pneg %p255
        $region74: #{decoder_forward.1} parent=51 // pred_check_branch
          %1692 = sbr.rel (%p1690) target = $region76
        $region75: #{decoder_forward.1} parent=51 // pred_region
          %s1694 = ssub.s32 128, 128
          %1695 = vsyncadd [#allocation11], %s1694
          %s1697 = sshll.u32 [#allocation12], 4
          %s1698 = int_to_ptr.vmem [resolvable:$true] %s1697
          %1700 = dma.vmem_to_hbm [thread:$0]  %s1698, 128, %s11, [#allocation11]
        $region76: #{decoder_forward.1} parent=51 // pred_fallthru
          _
        // Predicated region
        $region77: #{decoder_forward.1} parent=51 // pred_check
          %p1701 = pneg %p213
        $region78: #{decoder_forward.1} parent=51 // pred_check_branch
          %1703 = sbr.rel (%p1701) target = $region80
        $region79: #{decoder_forward.1} parent=51 // pred_region
          %1704 = dma.done [#allocation8], 128
        $region80: #{decoder_forward.1} parent=51 // pred_fallthru
          _
        // Predicated region
        $region81: #{decoder_forward.1} parent=51 // pred_check
          %p1705 = pneg %p234
        $region82: #{decoder_forward.1} parent=51 // pred_check_branch
          %1707 = sbr.rel (%p1705) target = $region84
        $region83: #{decoder_forward.1} parent=51 // pred_region
          %1708 = dma.done [#allocation11], 32
        $region84: #{decoder_forward.1} parent=51 // pred_fallthru
          _
        // Predicated region
        $region85: #{decoder_forward.1} parent=51 // pred_check
          %p1709 = pneg %p255
        $region86: #{decoder_forward.1} parent=51 // pred_check_branch
          %1711 = sbr.rel (%p1709) target = $region88
        $region87: #{decoder_forward.1} parent=51 // pred_region
          %1712 = dma.done [#allocation11], 128
        $region88: #{decoder_forward.1} parent=51 // pred_fallthru
          _
      $region52: #{decoder_forward.1} parent=5 // pred_fallthru
        _
      %p1713 = scmp.le.s32.totalorder 2, %s27
      // Predicated region
      $region89: #{decoder_forward.1} parent=5 // pred_check
        %p1714 = pneg %p1713
      $region90: #{decoder_forward.1} parent=5 // pred_check_branch
        %1716 = sbr.rel (%p1714) target = $region92
      $region91: #{decoder_forward.1} parent=5 // pred_region
        %s1717 = ssub.s32 %s27, 2
      $region92: #{decoder_forward.1} parent=5 // pred_fallthru
        _
    $region6: #{decoder_forward.1} parent=1 // loop_footer
      %s31 = sadd.s32 1, %s27
    $region7: #{decoder_forward.1} parent=1 // loop_footer_branch
      %26 = sbr.rel target = $region3
    $region8: #{decoder_forward.1} parent=1 // loop_exit
      _
    %1718 = vsyncpa [#allocation7], 1
    %s1719 = scalar_lea.sflag [#allocation7], 1
    %1720 = vsyncpa %s1719, 1
    %1721 = vsyncpa [#allocation8], 1
    %s1722 = scalar_lea.sflag [#allocation8], 1
    %1723 = vsyncpa %s1722, 1
    %1724 = vsyncpa [#allocation11], 1

</llo_original>
